<compile_context>
chip_gen: v6e
topology: v6e:2x2x1
jax: 0.10.0
libtpu: 0.0.40
codegen_flags: <defaults>
</compile_context>

<pallas_src>
import functools

import numpy as np

import jax
import jax.numpy as jnp
from jax import lax
from jax.experimental import pallas as pl
from jax.experimental.pallas import tpu as pltpu


def _ceil_to(x, m):
    return (x + m - 1) // m * m


# -----------------------------------------------------------------------------
# Kernel A: 3x3 conv (padding=1) + bias, optionally fused with an input-side
# affine+ReLU (the previous layer's BatchNorm), emitting per-image centered BN
# statistics for the *following* BatchNorm.  One grid step == one image.
# -----------------------------------------------------------------------------
def conv3x3_kernel(x_ref, isc_ref, ish_ref, w_ref, b_ref,
                   y_ref, s_ref, q_ref, *, H, W, fuse_in):
    # x_ref   : (1, Cp, L)   input, channels on sublanes, H*W flat on lanes
    # isc/ish : (Cp, 1)      previous-layer BN affine (used only when fuse_in)
    # w_ref   : (Cop, 9*Cp)  bf16 tap-major packed 3x3 weights
    # b_ref   : (Cop, 1)     bias
    # y_ref   : (1, Cop, L)  raw conv output (pre-BN)
    # s_ref   : (1, Cop, 1)  per-image sum over L
    # q_ref   : (1, Cop, 1)  per-image centered sum of squares
    L = H * W
    Cp = x_ref.shape[1]

    x = x_ref[0]                                            # (Cp, L) f32
    if fuse_in:
        # relu(bn(prev_conv)) applied on load -> no extra HBM round trip.
        x = jnp.maximum(x * isc_ref[...] + ish_ref[...], 0.0)

    # Zero halo along the flattened spatial axis (value-level, no scratch).
    PAD = W + 1
    zp = jnp.zeros((Cp, PAD), jnp.float32)
    xp = jnp.concatenate([zp, x, zp], axis=1)               # (Cp, L + 2*PAD)

    # Column masks handle the left/right image borders (row wrap-around);
    # the top/bottom borders are handled by the zero halo itself.
    col = lax.broadcasted_iota(jnp.int32, (Cp, L), 1) % W
    lmask = col >= 1                                        # valid for kw == 0
    rmask = col <= W - 2                                    # valid for kw == 2

    taps = []
    for kh in range(3):                                     # static unroll
        for kw in range(3):
            off = (kh - 1) * W + (kw - 1)
            t = xp[:, PAD + off:PAD + off + L]              # shifted copy
            if kw == 0:
                t = jnp.where(lmask, t, 0.0)
            elif kw == 2:
                t = jnp.where(rmask, t, 0.0)
            taps.append(t)

    # Single MXU contraction with K = 9*Cp (bf16 operands, f32 accumulation).
    tmat = jnp.concatenate(taps, axis=0).astype(jnp.bfloat16)   # (9*Cp, L)
    acc = jnp.dot(w_ref[...], tmat, preferred_element_type=jnp.float32)
    acc = acc + b_ref[...]                                   # (Cop, L)

    y_ref[0] = acc

    # Per-image BN statistics (centered per image for numerical stability);
    # combined across the batch in the wrapper.
    s = jnp.sum(acc, axis=1, keepdims=True)                  # (Cop, 1)
    m = s * (1.0 / L)
    d = acc - m
    s_ref[0] = s
    q_ref[0] = jnp.sum(d * d, axis=1, keepdims=True)


def conv3x3_bn_stats(x_ncl, w_mat_bf16, bias_col, H, W,
                     in_scale=None, in_shift=None):
    """x_ncl: (N, Cp, L) f32 channel-padded input.  w_mat_bf16: (Cop, 9*Cp).
    bias_col: (Cop, 1).  Optionally fuses relu(x*in_scale + in_shift) on the
    input.  Returns raw conv output (N, Cop, L) and per-image stats (N,Cop,1)."""
    N, Cp, L = x_ncl.shape
    Cop = w_mat_bf16.shape[0]

    fuse = in_scale is not None
    if not fuse:
        in_scale = jnp.ones((Cp, 1), jnp.float32)
        in_shift = jnp.zeros((Cp, 1), jnp.float32)

    kernel = functools.partial(conv3x3_kernel, H=H, W=W, fuse_in=fuse)
    return pl.pallas_call(
        kernel,
        grid=(N,),
        in_specs=[pl.BlockSpec((1, Cp, L), lambda n: (n, 0, 0)),
                  pl.BlockSpec((Cp, 1), lambda n: (0, 0)),
                  pl.BlockSpec((Cp, 1), lambda n: (0, 0)),
                  pl.BlockSpec((Cop, 9 * Cp), lambda n: (0, 0)),
                  pl.BlockSpec((Cop, 1), lambda n: (0, 0))],
        out_specs=(pl.BlockSpec((1, Cop, L), lambda n: (n, 0, 0)),
                   pl.BlockSpec((1, Cop, 1), lambda n: (n, 0, 0)),
                   pl.BlockSpec((1, Cop, 1), lambda n: (n, 0, 0))),
        out_shape=(jax.ShapeDtypeStruct((N, Cop, L), jnp.float32),
                   jax.ShapeDtypeStruct((N, Cop, 1), jnp.float32),
                   jax.ShapeDtypeStruct((N, Cop, 1), jnp.float32)),
        compiler_params=pltpu.CompilerParams(
            dimension_semantics=("parallel",)),   # per-image stats -> parallel
    )(x_ncl, in_scale, in_shift, w_mat_bf16, bias_col)


def bn_scale_shift(s, q, l_per_image, gamma, beta, eps=1e-5):
    """Combine per-image centered stats into batch BN, folded to y*scale+shift
    (biased variance, matching nn.BatchNorm2d's training-mode normalization)."""
    n = s.shape[0]
    total = n * l_per_image
    s_img = s[:, :, 0]                                       # (N, C)
    mean = jnp.sum(s_img, axis=0) / total                    # (C,)
    m_img = s_img / l_per_image                              # (N, C)
    var = (jnp.sum(q[:, :, 0], axis=0)
           + l_per_image * jnp.sum((m_img - mean) ** 2, axis=0)) / total
    var = jnp.maximum(var, 0.0)
    scale = gamma * lax.rsqrt(var + eps)
    shift = beta - mean * scale
    return scale, shift


# -----------------------------------------------------------------------------
# Kernel B: fused BatchNorm (affine) + ReLU + 2x2 max pool (floor semantics).
# Produces both the full-resolution activation and the pooled map.
# -----------------------------------------------------------------------------
def bn_relu_pool_kernel(y_ref, sc_ref, sh_ref, sel_ref, a_ref, p_ref, *, W):
    # y_ref  : (1, C, L)  raw conv2 output
    # sel_ref: (L, Lp)    0/1 matrix selecting each pool window's top-left corner
    # a_ref  : (1, C, L)  post-BN+ReLU activation
    # p_ref  : (1, C, Lp) 2x2 max-pooled activation
    y = y_ref[0]
    a = jnp.maximum(y * sc_ref[...] + sh_ref[...], 0.0)
    a_ref[0] = a

    # Lane-rotated copies give the (w+1), (h+1) and (h+1,w+1) neighbours.
    # Wrapped values are never selected by `sel` (only even rows/cols < 2*Ho/Wo).
    s1 = jnp.concatenate([a[:, 1:], a[:, :1]], axis=1)          # a[l+1]
    sW = jnp.concatenate([a[:, W:], a[:, :W]], axis=1)          # a[l+W]
    sW1 = jnp.concatenate([a[:, W + 1:], a[:, :W + 1]], axis=1) # a[l+W+1]
    m4 = jnp.maximum(jnp.maximum(a, s1), jnp.maximum(sW, sW1))

    # Exact strided compaction via a 0/1 selection matmul (MXU, no gathers).
    p_ref[0] = jnp.dot(m4, sel_ref[...], preferred_element_type=jnp.float32)


def bn_relu_pool(y_ncl, scale_col, shift_col, sel, H, W):
    N, C, L = y_ncl.shape
    Lp = sel.shape[1]
    kernel = functools.partial(bn_relu_pool_kernel, W=W)
    return pl.pallas_call(
        kernel,
        grid=(N,),
        in_specs=[pl.BlockSpec((1, C, L), lambda n: (n, 0, 0)),
                  pl.BlockSpec((C, 1), lambda n: (0, 0)),
                  pl.BlockSpec((C, 1), lambda n: (0, 0)),
                  pl.BlockSpec((L, Lp), lambda n: (0, 0))],
        out_specs=(pl.BlockSpec((1, C, L), lambda n: (n, 0, 0)),
                   pl.BlockSpec((1, C, Lp), lambda n: (n, 0, 0))),
        out_shape=(jax.ShapeDtypeStruct((N, C, L), jnp.float32),
                   jax.ShapeDtypeStruct((N, C, Lp), jnp.float32)),
        compiler_params=pltpu.CompilerParams(
            dimension_semantics=("parallel",)),
    )(y_ncl, scale_col, shift_col, sel)


# -----------------------------------------------------------------------------
# Wrapper helpers (all tiny / trace-time constants)
# -----------------------------------------------------------------------------
def _pad_vec(v, target, fill):
    c = v.shape[0]
    v = v.astype(jnp.float32)
    if c == target:
        return v
    return jnp.concatenate([v, jnp.full((target - c,), fill, jnp.float32)])


def _pack_conv_weights(w_hwio, cin_p, cout_p):
    """(3,3,Cin,Cout) HWIO -> (Cout_p, 9*Cin_p) bf16, tap-major, zero-padded."""
    _, _, cin, cout = w_hwio.shape
    w = jnp.pad(w_hwio.astype(jnp.float32),
                ((0, 0), (0, 0), (0, cin_p - cin), (0, cout_p - cout)))
    return (jnp.transpose(w, (3, 0, 1, 2))
            .reshape(cout_p, 9 * cin_p).astype(jnp.bfloat16))


def _pool_select_matrix(H, W):
    """0/1 matrix mapping flat spatial index -> pooled index (floor semantics)."""
    Ho, Wo = H // 2, W // 2
    L, Lp = H * W, Ho * Wo
    sel = np.zeros((L, Lp), np.float32)
    for ho in range(Ho):
        for wo in range(Wo):
            sel[(2 * ho) * W + 2 * wo, ho * Wo + wo] = 1.0
    return jnp.asarray(sel)


# -----------------------------------------------------------------------------
# Full encoder_block forward: x = conv_block(inputs); p = maxpool2x2(x)
# -----------------------------------------------------------------------------
def encoder_block_forward(x_nchw, params, eps=1e-5):
    N, Cin, H, W = x_nchw.shape
    L = H * W
    Ho, Wo = H // 2, W // 2
    C1 = params["w1"].shape[-1]
    C2 = params["w2"].shape[-1]
    Cin_p, C1_p, C2_p = _ceil_to(Cin, 8), _ceil_to(C1, 8), _ceil_to(C2, 8)

    # NCHW -> (N, C, H*W) is a free reshape (spatial lives on the lane axis);
    # pad channels up to a multiple of 8 so in-kernel sublane ops are aligned.
    x = x_nchw.reshape(N, Cin, L).astype(jnp.float32)
    if Cin_p != Cin:
        x = jnp.pad(x, ((0, 0), (0, Cin_p - Cin), (0, 0)))

    w1m = _pack_conv_weights(params["w1"], Cin_p, C1_p)
    b1 = _pad_vec(params["b1"], C1_p, 0.0).reshape(C1_p, 1)
    g1 = _pad_vec(params["gamma1"], C1_p, 1.0)
    be1 = _pad_vec(params["beta1"], C1_p, 0.0)

    w2m = _pack_conv_weights(params["w2"], C1_p, C2_p)
    b2 = _pad_vec(params["b2"], C2_p, 0.0).reshape(C2_p, 1)
    g2 = _pad_vec(params["gamma2"], C2_p, 1.0)
    be2 = _pad_vec(params["beta2"], C2_p, 0.0)

    # conv1 (+ bn1 batch statistics)
    y1, s1, q1 = conv3x3_bn_stats(x, w1m, b1, H, W)
    scale1, shift1 = bn_scale_shift(s1, q1, L, g1, be1, eps)

    # conv2 with bn1+ReLU fused into its input path (+ bn2 batch statistics)
    y2, s2, q2 = conv3x3_bn_stats(y1, w2m, b2, H, W,
                                  in_scale=scale1.reshape(C1_p, 1),
                                  in_shift=shift1.reshape(C1_p, 1))
    scale2, shift2 = bn_scale_shift(s2, q2, L, g2, be2, eps)

    # bn2 + ReLU + 2x2 max pool, fused
    sel = _pool_select_matrix(H, W)
    a2, p = bn_relu_pool(y2, scale2.reshape(C2_p, 1), shift2.reshape(C2_p, 1),
                         sel, H, W)

    if C2_p != C2:
        a2 = a2[:, :C2, :]
        p = p[:, :C2, :]
    return a2.reshape(N, C2, H, W), p.reshape(N, C2, Ho, Wo)


def init_params(key, in_c, out_c):
    # deterministic synthetic parameters (shapes as in the PyTorch module);
    # conv weights stored HWIO (3, 3, Cin, Cout), BN affine gamma=1, beta=0.
    k1, k2, k3, k4 = jax.random.split(key, 4)
    return {
        "w1": 0.1 * jax.random.normal(k1, (3, 3, in_c, out_c), jnp.float32),
        "b1": 0.1 * jax.random.normal(k2, (out_c,), jnp.float32),
        "gamma1": jnp.ones((out_c,), jnp.float32),
        "beta1": jnp.zeros((out_c,), jnp.float32),
        "w2": 0.1 * jax.random.normal(k3, (3, 3, out_c, out_c), jnp.float32),
        "b2": 0.1 * jax.random.normal(k4, (out_c,), jnp.float32),
        "gamma2": jnp.ones((out_c,), jnp.float32),
        "beta2": jnp.zeros((out_c,), jnp.float32),
    }


# Pure-JAX reference of the same forward pass (used only as a sanity check).
def reference_forward(x_nchw, params, eps=1e-5):
    x = jnp.transpose(x_nchw, (0, 2, 3, 1)).astype(jnp.float32)

    def conv(v, w, b):
        y = lax.conv_general_dilated(
            v, w, window_strides=(1, 1), padding=((1, 1), (1, 1)),
            dimension_numbers=("NHWC", "HWIO", "NHWC"),
            precision=lax.Precision.HIGHEST)
        return y + b

    def bn_relu(y, gamma, beta):
        mean = jnp.mean(y, axis=(0, 1, 2))
        var = jnp.mean((y - mean) ** 2, axis=(0, 1, 2))
        return jnp.maximum((y - mean) * lax.rsqrt(var + eps) * gamma + beta, 0.0)

    a1 = bn_relu(conv(x, params["w1"], params["b1"]),
                 params["gamma1"], params["beta1"])
    a2 = bn_relu(conv(a1, params["w2"], params["b2"]),
                 params["gamma2"], params["beta2"])
    N, H, W, C = a2.shape
    Ho, Wo = H // 2, W // 2
    pool = a2[:, :2 * Ho, :2 * Wo, :].reshape(N, Ho, 2, Wo, 2, C).max(axis=(2, 4))
    return jnp.transpose(a2, (0, 3, 1, 2)), jnp.transpose(pool, (0, 3, 1, 2))


if __name__ == "__main__":
    key = jax.random.PRNGKey(0)
    kx, kp = jax.random.split(key)

    N, Cin, Cout, H, W = 2, 4, 8, 16, 16
    x = jax.random.normal(kx, (N, Cin, H, W), jnp.float32)
    params = init_params(kp, Cin, Cout)

    fwd = jax.jit(encoder_block_forward)
    x_out, p_out = fwd(x, params)
    jax.block_until_ready((x_out, p_out))

    assert x_out.shape == (N, Cout, H, W), x_out.shape
    assert p_out.shape == (N, Cout, H // 2, W // 2), p_out.shape
    assert bool(jnp.all(x_out >= 0.0)) and bool(jnp.all(p_out >= 0.0))  # post-ReLU

    # numerical sanity check against the pure-JAX reference (tolerance covers
    # the bf16 MXU operands used inside the kernels; accumulation stays f32)
    x_ref_out, p_ref_out = jax.jit(reference_forward)(x, params)
    assert bool(jnp.allclose(x_out, x_ref_out, atol=4e-2, rtol=4e-2))
    assert bool(jnp.allclose(p_out, p_ref_out, atol=4e-2, rtol=4e-2))

    print("KERNEL_OK")
</pallas_src>

<mosaic_0001>
module attributes {stable_mosaic.version = 11 : i64} {
  func.func @conv3x3_kernel(%arg0: i32, %arg1: memref<1x8x256xf32, #tpu.memory_space<vmem>>, %arg2: memref<8x1xf32, #tpu.memory_space<vmem>>, %arg3: memref<8x1xf32, #tpu.memory_space<vmem>>, %arg4: memref<8x72xbf16, #tpu.memory_space<vmem>>, %arg5: memref<8x1xf32, #tpu.memory_space<vmem>>, %arg6: memref<1x8x256xf32, #tpu.memory_space<vmem>>, %arg7: memref<1x8x1xf32, #tpu.memory_space<vmem>>, %arg8: memref<1x8x1xf32, #tpu.memory_space<vmem>>) attributes {dimension_semantics = [#tpu.dimension_semantics<parallel>], iteration_bounds = array<i64: 2>, scalar_prefetch = 0 : i64, scratch_operands = 0 : i64, tpu.core_type = #tpu.core_type<tc>, window_params = [{transform_indices = @transform_0, window_bounds = array<i64: 1, 8, 256>}, {pipeline_mode = #tpu.pipeline_mode<synchronous>, transform_indices = @transform_1, window_bounds = array<i64: 8, 1>}, {pipeline_mode = #tpu.pipeline_mode<synchronous>, transform_indices = @transform_2, window_bounds = array<i64: 8, 1>}, {pipeline_mode = #tpu.pipeline_mode<synchronous>, transform_indices = @transform_3, window_bounds = array<i64: 8, 72>}, {pipeline_mode = #tpu.pipeline_mode<synchronous>, transform_indices = @transform_4, window_bounds = array<i64: 8, 1>}, {transform_indices = @transform_5, window_bounds = array<i64: 1, 8, 256>}, {transform_indices = @transform_6, window_bounds = array<i64: 1, 8, 1>}, {transform_indices = @transform_7, window_bounds = array<i64: 1, 8, 1>}]} {
    %c0 = arith.constant 0 : index
    %c0_0 = arith.constant 0 : index
    %c0_1 = arith.constant 0 : index
    %0 = vector.load %arg1[%c0, %c0_0, %c0_1] : memref<1x8x256xf32, #tpu.memory_space<vmem>>, vector<1x8x256xf32>
    %1 = vector.shape_cast %0 : vector<1x8x256xf32> to vector<8x256xf32>
    %cst = arith.constant 0.000000e+00 : f32
    %2 = vector.broadcast %cst : f32 to vector<8x17xf32>
    %3 = tpu.concatenate %2, %1, %2 in 1 : vector<8x17xf32>, vector<8x256xf32>, vector<8x17xf32> -> vector<8x290xf32>
    %4 = tpu.iota {dimensions = array<i32: 1>} : vector<8x256xi32>
    %c16_i32 = arith.constant 16 : i32
    %c0_i32 = arith.constant 0 : i32
    %5 = arith.cmpi eq, %c16_i32, %c0_i32 : i32
    %c1_i32 = arith.constant 1 : i32
    %6 = arith.select %5, %c1_i32, %c16_i32 : i32
    %7 = vector.broadcast %6 : i32 to vector<8x256xi32>
    %8 = arith.remsi %4, %7 : vector<8x256xi32>
    %c0_i32_2 = arith.constant 0 : i32
    %9 = vector.broadcast %c0_i32_2 : i32 to vector<8x256xi32>
    %10 = arith.cmpi ne, %8, %9 : vector<8x256xi32>
    %c0_i32_3 = arith.constant 0 : i32
    %11 = vector.broadcast %c0_i32_3 : i32 to vector<8x256xi32>
    %12 = arith.cmpi slt, %8, %11 : vector<8x256xi32>
    %c0_i32_4 = arith.constant 0 : i32
    %13 = arith.cmpi slt, %6, %c0_i32_4 : i32
    %14 = vector.broadcast %13 : i1 to vector<8x256xi1>
    %15 = vector.broadcast %14 : vector<8x256xi1> to vector<8x256xi1>
    %16 = arith.xori %12, %15 : vector<8x256xi1>
    %17 = arith.andi %16, %10 : vector<8x256xi1>
    %18 = vector.broadcast %6 : i32 to vector<8x256xi32>
    %19 = arith.addi %8, %18 : vector<8x256xi32>
    %20 = arith.select %17, %19, %8 : vector<8x256xi1>, vector<8x256xi32>
    %c1_i32_5 = arith.constant 1 : i32
    %21 = vector.broadcast %c1_i32_5 : i32 to vector<8x256xi32>
    %22 = arith.cmpi sge, %20, %21 : vector<8x256xi32>
    %c14_i32 = arith.constant 14 : i32
    %23 = vector.broadcast %c14_i32 : i32 to vector<8x256xi32>
    %24 = arith.cmpi sle, %20, %23 : vector<8x256xi32>
    %25 = vector.extract_strided_slice %3 {offsets = [0, 0], sizes = [8, 256], strides = [1, 1]} : vector<8x290xf32> to vector<8x256xf32>
    %cst_6 = arith.constant 0.000000e+00 : f32
    %26 = vector.broadcast %cst_6 : f32 to vector<8x256xf32>
    %27 = arith.select %22, %25, %26 : vector<8x256xi1>, vector<8x256xf32>
    %28 = vector.extract_strided_slice %3 {offsets = [0, 1], sizes = [8, 256], strides = [1, 1]} : vector<8x290xf32> to vector<8x256xf32>
    %29 = vector.extract_strided_slice %3 {offsets = [0, 2], sizes = [8, 256], strides = [1, 1]} : vector<8x290xf32> to vector<8x256xf32>
    %cst_7 = arith.constant 0.000000e+00 : f32
    %30 = vector.broadcast %cst_7 : f32 to vector<8x256xf32>
    %31 = arith.select %24, %29, %30 : vector<8x256xi1>, vector<8x256xf32>
    %32 = vector.extract_strided_slice %3 {offsets = [0, 16], sizes = [8, 256], strides = [1, 1]} : vector<8x290xf32> to vector<8x256xf32>
    %cst_8 = arith.constant 0.000000e+00 : f32
    %33 = vector.broadcast %cst_8 : f32 to vector<8x256xf32>
    %34 = arith.select %22, %32, %33 : vector<8x256xi1>, vector<8x256xf32>
    %35 = vector.extract_strided_slice %3 {offsets = [0, 17], sizes = [8, 256], strides = [1, 1]} : vector<8x290xf32> to vector<8x256xf32>
    %36 = vector.extract_strided_slice %3 {offsets = [0, 18], sizes = [8, 256], strides = [1, 1]} : vector<8x290xf32> to vector<8x256xf32>
    %cst_9 = arith.constant 0.000000e+00 : f32
    %37 = vector.broadcast %cst_9 : f32 to vector<8x256xf32>
    %38 = arith.select %24, %36, %37 : vector<8x256xi1>, vector<8x256xf32>
    %39 = vector.extract_strided_slice %3 {offsets = [0, 32], sizes = [8, 256], strides = [1, 1]} : vector<8x290xf32> to vector<8x256xf32>
    %cst_10 = arith.constant 0.000000e+00 : f32
    %40 = vector.broadcast %cst_10 : f32 to vector<8x256xf32>
    %41 = arith.select %22, %39, %40 : vector<8x256xi1>, vector<8x256xf32>
    %42 = vector.extract_strided_slice %3 {offsets = [0, 33], sizes = [8, 256], strides = [1, 1]} : vector<8x290xf32> to vector<8x256xf32>
    %43 = vector.extract_strided_slice %3 {offsets = [0, 34], sizes = [8, 256], strides = [1, 1]} : vector<8x290xf32> to vector<8x256xf32>
    %cst_11 = arith.constant 0.000000e+00 : f32
    %44 = vector.broadcast %cst_11 : f32 to vector<8x256xf32>
    %45 = arith.select %24, %43, %44 : vector<8x256xi1>, vector<8x256xf32>
    %46 = tpu.concatenate %27, %28, %31, %34, %35, %38, %41, %42, %45 in 0 : vector<8x256xf32>, vector<8x256xf32>, vector<8x256xf32>, vector<8x256xf32>, vector<8x256xf32>, vector<8x256xf32>, vector<8x256xf32>, vector<8x256xf32>, vector<8x256xf32> -> vector<72x256xf32>
    %47 = arith.truncf %46 : vector<72x256xf32> to vector<72x256xbf16>
    %c0_12 = arith.constant 0 : index
    %c0_13 = arith.constant 0 : index
    %48 = vector.load %arg4[%c0_12, %c0_13] : memref<8x72xbf16, #tpu.memory_space<vmem>>, vector<8x72xbf16>
    %cst_14 = arith.constant dense<0.000000e+00> : vector<8x256xf32>
    %49 = tpu.matmul %48, %47, %cst_14 {dimension_numbers = #tpu.dot_dimension_numbers<[1], [0], [0], [1], [0, 0, 1, 1], [], []>} : vector<8x72xbf16>, vector<72x256xbf16>, vector<8x256xf32> -> vector<8x256xf32>
    %c0_15 = arith.constant 0 : index
    %c0_16 = arith.constant 0 : index
    %50 = vector.load %arg5[%c0_15, %c0_16] : memref<8x1xf32, #tpu.memory_space<vmem>>, vector<8x1xf32>
    %51 = vector.broadcast %50 : vector<8x1xf32> to vector<8x256xf32>
    %52 = arith.addf %49, %51 : vector<8x256xf32>
    %c0_17 = arith.constant 0 : index
    %c0_18 = arith.constant 0 : index
    %c0_19 = arith.constant 0 : index
    %53 = vector.load %arg6[%c0_17, %c0_18, %c0_19] : memref<1x8x256xf32, #tpu.memory_space<vmem>>, vector<1x8x256xf32>
    %54 = vector.shape_cast %53 : vector<1x8x256xf32> to vector<8x256xf32>
    %55 = vector.shape_cast %52 : vector<8x256xf32> to vector<1x8x256xf32>
    tpu.vector_store %arg6[%c0_17, %c0_18, %c0_19], %55 {strides = array<i32>} : memref<1x8x256xf32, #tpu.memory_space<vmem>>, vector<1x8x256xf32>,
    %cst_20 = arith.constant dense<0.000000e+00> : vector<8xf32>
    %56 = vector.multi_reduction <add>, %52, %cst_20 [1] : vector<8x256xf32> to vector<8xf32>
    %57 = vector.shape_cast %56 : vector<8xf32> to vector<8x1xf32>
    %cst_21 = arith.constant 3.906250e-03 : f32
    %58 = vector.broadcast %cst_21 : f32 to vector<8x1xf32>
    %59 = arith.mulf %57, %58 : vector<8x1xf32>
    %60 = vector.broadcast %59 : vector<8x1xf32> to vector<8x256xf32>
    %61 = arith.subf %52, %60 : vector<8x256xf32>
    %c0_22 = arith.constant 0 : index
    %c0_23 = arith.constant 0 : index
    %c0_24 = arith.constant 0 : index
    %62 = vector.load %arg7[%c0_22, %c0_23, %c0_24] : memref<1x8x1xf32, #tpu.memory_space<vmem>>, vector<1x8x1xf32>
    %63 = vector.shape_cast %62 : vector<1x8x1xf32> to vector<8x1xf32>
    %64 = vector.shape_cast %57 : vector<8x1xf32> to vector<1x8x1xf32>
    tpu.vector_store %arg7[%c0_22, %c0_23, %c0_24], %64 {strides = array<i32>} : memref<1x8x1xf32, #tpu.memory_space<vmem>>, vector<1x8x1xf32>,
    %65 = arith.mulf %61, %61 : vector<8x256xf32>
    %cst_25 = arith.constant dense<0.000000e+00> : vector<8xf32>
    %66 = vector.multi_reduction <add>, %65, %cst_25 [1] : vector<8x256xf32> to vector<8xf32>
    %67 = vector.shape_cast %66 : vector<8xf32> to vector<8x1xf32>
    %c0_26 = arith.constant 0 : index
    %c0_27 = arith.constant 0 : index
    %c0_28 = arith.constant 0 : index
    %68 = vector.load %arg8[%c0_26, %c0_27, %c0_28] : memref<1x8x1xf32, #tpu.memory_space<vmem>>, vector<1x8x1xf32>
    %69 = vector.shape_cast %68 : vector<1x8x1xf32> to vector<8x1xf32>
    %70 = vector.shape_cast %67 : vector<8x1xf32> to vector<1x8x1xf32>
    tpu.vector_store %arg8[%c0_26, %c0_27, %c0_28], %70 {strides = array<i32>} : memref<1x8x1xf32, #tpu.memory_space<vmem>>, vector<1x8x1xf32>,
    return
  }
  func.func @transform_0(%arg0: i32) -> (i32, i32, i32) {
    %c0_i32 = arith.constant 0 : i32
    %c0_i32_0 = arith.constant 0 : i32
    %c0_i32_1 = arith.constant 0 : i32
    return %arg0, %c0_i32, %c0_i32_0 : i32, i32, i32
  }
  func.func @transform_1(%arg0: i32) -> (i32, i32) {
    %c0_i32 = arith.constant 0 : i32
    %c0_i32_0 = arith.constant 0 : i32
    %c0_i32_1 = arith.constant 0 : i32
    return %c0_i32, %c0_i32_0 : i32, i32
  }
  func.func @transform_2(%arg0: i32) -> (i32, i32) {
    %c0_i32 = arith.constant 0 : i32
    %c0_i32_0 = arith.constant 0 : i32
    %c0_i32_1 = arith.constant 0 : i32
    return %c0_i32, %c0_i32_0 : i32, i32
  }
  func.func @transform_3(%arg0: i32) -> (i32, i32) {
    %c0_i32 = arith.constant 0 : i32
    %c0_i32_0 = arith.constant 0 : i32
    %c0_i32_1 = arith.constant 0 : i32
    return %c0_i32, %c0_i32_0 : i32, i32
  }
  func.func @transform_4(%arg0: i32) -> (i32, i32) {
    %c0_i32 = arith.constant 0 : i32
    %c0_i32_0 = arith.constant 0 : i32
    %c0_i32_1 = arith.constant 0 : i32
    return %c0_i32, %c0_i32_0 : i32, i32
  }
  func.func @transform_5(%arg0: i32) -> (i32, i32, i32) {
    %c0_i32 = arith.constant 0 : i32
    %c0_i32_0 = arith.constant 0 : i32
    %c0_i32_1 = arith.constant 0 : i32
    return %arg0, %c0_i32, %c0_i32_0 : i32, i32, i32
  }
  func.func @transform_6(%arg0: i32) -> (i32, i32, i32) {
    %c0_i32 = arith.constant 0 : i32
    %c0_i32_0 = arith.constant 0 : i32
    %c0_i32_1 = arith.constant 0 : i32
    return %arg0, %c0_i32, %c0_i32_0 : i32, i32, i32
  }
  func.func @transform_7(%arg0: i32) -> (i32, i32, i32) {
    %c0_i32 = arith.constant 0 : i32
    %c0_i32_0 = arith.constant 0 : i32
    %c0_i32_1 = arith.constant 0 : i32
    return %arg0, %c0_i32, %c0_i32_0 : i32, i32, i32
  }
}

module attributes {stable_mosaic.version = 11 : i64} {
  func.func @bn_relu_pool_kernel(%arg0: i32, %arg1: memref<1x8x256xf32, #tpu.memory_space<vmem>>, %arg2: memref<8x1xf32, #tpu.memory_space<vmem>>, %arg3: memref<8x1xf32, #tpu.memory_space<vmem>>, %arg4: memref<256x64xf32, #tpu.memory_space<vmem>>, %arg5: memref<1x8x256xf32, #tpu.memory_space<vmem>>, %arg6: memref<1x8x64xf32, #tpu.memory_space<vmem>>) attributes {dimension_semantics = [#tpu.dimension_semantics<parallel>], iteration_bounds = array<i64: 2>, scalar_prefetch = 0 : i64, scratch_operands = 0 : i64, tpu.core_type = #tpu.core_type<tc>, window_params = [{transform_indices = @transform_0, window_bounds = array<i64: 1, 8, 256>}, {pipeline_mode = #tpu.pipeline_mode<synchronous>, transform_indices = @transform_1, window_bounds = array<i64: 8, 1>}, {pipeline_mode = #tpu.pipeline_mode<synchronous>, transform_indices = @transform_2, window_bounds = array<i64: 8, 1>}, {pipeline_mode = #tpu.pipeline_mode<synchronous>, transform_indices = @transform_3, window_bounds = array<i64: 256, 64>}, {transform_indices = @transform_4, window_bounds = array<i64: 1, 8, 256>}, {transform_indices = @transform_5, window_bounds = array<i64: 1, 8, 64>}]} {
    %c0 = arith.constant 0 : index
    %c0_0 = arith.constant 0 : index
    %c0_1 = arith.constant 0 : index
    %0 = vector.load %arg1[%c0, %c0_0, %c0_1] : memref<1x8x256xf32, #tpu.memory_space<vmem>>, vector<1x8x256xf32>
    %1 = vector.shape_cast %0 : vector<1x8x256xf32> to vector<8x256xf32>
    %c0_2 = arith.constant 0 : index
    %c0_3 = arith.constant 0 : index
    %2 = vector.load %arg2[%c0_2, %c0_3] : memref<8x1xf32, #tpu.memory_space<vmem>>, vector<8x1xf32>
    %3 = vector.broadcast %2 : vector<8x1xf32> to vector<8x256xf32>
    %4 = arith.mulf %1, %3 : vector<8x256xf32>
    %c0_4 = arith.constant 0 : index
    %c0_5 = arith.constant 0 : index
    %5 = vector.load %arg3[%c0_4, %c0_5] : memref<8x1xf32, #tpu.memory_space<vmem>>, vector<8x1xf32>
    %6 = vector.broadcast %5 : vector<8x1xf32> to vector<8x256xf32>
    %7 = arith.addf %4, %6 : vector<8x256xf32>
    %cst = arith.constant 0.000000e+00 : f32
    %8 = vector.broadcast %cst : f32 to vector<8x256xf32>
    %9 = arith.maximumf %7, %8 : vector<8x256xf32>
    %c0_6 = arith.constant 0 : index
    %c0_7 = arith.constant 0 : index
    %c0_8 = arith.constant 0 : index
    %10 = vector.load %arg5[%c0_6, %c0_7, %c0_8] : memref<1x8x256xf32, #tpu.memory_space<vmem>>, vector<1x8x256xf32>
    %11 = vector.shape_cast %10 : vector<1x8x256xf32> to vector<8x256xf32>
    %12 = vector.shape_cast %9 : vector<8x256xf32> to vector<1x8x256xf32>
    tpu.vector_store %arg5[%c0_6, %c0_7, %c0_8], %12 {strides = array<i32>} : memref<1x8x256xf32, #tpu.memory_space<vmem>>, vector<1x8x256xf32>,
    %13 = vector.extract_strided_slice %9 {offsets = [0, 1], sizes = [8, 255], strides = [1, 1]} : vector<8x256xf32> to vector<8x255xf32>
    %14 = vector.extract_strided_slice %9 {offsets = [0, 0], sizes = [8, 1], strides = [1, 1]} : vector<8x256xf32> to vector<8x1xf32>
    %15 = tpu.concatenate %13, %14 in 1 : vector<8x255xf32>, vector<8x1xf32> -> vector<8x256xf32>
    %16 = vector.extract_strided_slice %9 {offsets = [0, 16], sizes = [8, 240], strides = [1, 1]} : vector<8x256xf32> to vector<8x240xf32>
    %17 = vector.extract_strided_slice %9 {offsets = [0, 0], sizes = [8, 16], strides = [1, 1]} : vector<8x256xf32> to vector<8x16xf32>
    %18 = tpu.concatenate %16, %17 in 1 : vector<8x240xf32>, vector<8x16xf32> -> vector<8x256xf32>
    %19 = vector.extract_strided_slice %9 {offsets = [0, 17], sizes = [8, 239], strides = [1, 1]} : vector<8x256xf32> to vector<8x239xf32>
    %20 = vector.extract_strided_slice %9 {offsets = [0, 0], sizes = [8, 17], strides = [1, 1]} : vector<8x256xf32> to vector<8x17xf32>
    %21 = tpu.concatenate %19, %20 in 1 : vector<8x239xf32>, vector<8x17xf32> -> vector<8x256xf32>
    %22 = arith.maximumf %9, %15 : vector<8x256xf32>
    %23 = arith.maximumf %18, %21 : vector<8x256xf32>
    %24 = arith.maximumf %22, %23 : vector<8x256xf32>
    %c0_9 = arith.constant 0 : index
    %c0_10 = arith.constant 0 : index
    %25 = vector.load %arg4[%c0_9, %c0_10] : memref<256x64xf32, #tpu.memory_space<vmem>>, vector<256x64xf32>
    %cst_11 = arith.constant dense<0.000000e+00> : vector<8x64xf32>
    %26 = tpu.matmul %24, %25, %cst_11 {dimension_numbers = #tpu.dot_dimension_numbers<[1], [0], [0], [1], [0, 0, 1, 1], [], []>} : vector<8x256xf32>, vector<256x64xf32>, vector<8x64xf32> -> vector<8x64xf32>
    %c0_12 = arith.constant 0 : index
    %c0_13 = arith.constant 0 : index
    %c0_14 = arith.constant 0 : index
    %27 = vector.load %arg6[%c0_12, %c0_13, %c0_14] : memref<1x8x64xf32, #tpu.memory_space<vmem>>, vector<1x8x64xf32>
    %28 = vector.shape_cast %27 : vector<1x8x64xf32> to vector<8x64xf32>
    %29 = vector.shape_cast %26 : vector<8x64xf32> to vector<1x8x64xf32>
    tpu.vector_store %arg6[%c0_12, %c0_13, %c0_14], %29 {strides = array<i32>} : memref<1x8x64xf32, #tpu.memory_space<vmem>>, vector<1x8x64xf32>,
    return
  }
  func.func @transform_0(%arg0: i32) -> (i32, i32, i32) {
    %c0_i32 = arith.constant 0 : i32
    %c0_i32_0 = arith.constant 0 : i32
    %c0_i32_1 = arith.constant 0 : i32
    return %arg0, %c0_i32, %c0_i32_0 : i32, i32, i32
  }
  func.func @transform_1(%arg0: i32) -> (i32, i32) {
    %c0_i32 = arith.constant 0 : i32
    %c0_i32_0 = arith.constant 0 : i32
    %c0_i32_1 = arith.constant 0 : i32
    return %c0_i32, %c0_i32_0 : i32, i32
  }
  func.func @transform_2(%arg0: i32) -> (i32, i32) {
    %c0_i32 = arith.constant 0 : i32
    %c0_i32_0 = arith.constant 0 : i32
    %c0_i32_1 = arith.constant 0 : i32
    return %c0_i32, %c0_i32_0 : i32, i32
  }
  func.func @transform_3(%arg0: i32) -> (i32, i32) {
    %c0_i32 = arith.constant 0 : i32
    %c0_i32_0 = arith.constant 0 : i32
    %c0_i32_1 = arith.constant 0 : i32
    return %c0_i32, %c0_i32_0 : i32, i32
  }
  func.func @transform_4(%arg0: i32) -> (i32, i32, i32) {
    %c0_i32 = arith.constant 0 : i32
    %c0_i32_0 = arith.constant 0 : i32
    %c0_i32_1 = arith.constant 0 : i32
    return %arg0, %c0_i32, %c0_i32_0 : i32, i32, i32
  }
  func.func @transform_5(%arg0: i32) -> (i32, i32, i32) {
    %c0_i32 = arith.constant 0 : i32
    %c0_i32_0 = arith.constant 0 : i32
    %c0_i32_1 = arith.constant 0 : i32
    return %arg0, %c0_i32, %c0_i32_0 : i32, i32, i32
  }
}

module attributes {stable_mosaic.version = 11 : i64} {
  func.func @conv3x3_kernel(%arg0: i32, %arg1: memref<1x8x256xf32, #tpu.memory_space<vmem>>, %arg2: memref<8x1xf32, #tpu.memory_space<vmem>>, %arg3: memref<8x1xf32, #tpu.memory_space<vmem>>, %arg4: memref<8x72xbf16, #tpu.memory_space<vmem>>, %arg5: memref<8x1xf32, #tpu.memory_space<vmem>>, %arg6: memref<1x8x256xf32, #tpu.memory_space<vmem>>, %arg7: memref<1x8x1xf32, #tpu.memory_space<vmem>>, %arg8: memref<1x8x1xf32, #tpu.memory_space<vmem>>) attributes {dimension_semantics = [#tpu.dimension_semantics<parallel>], iteration_bounds = array<i64: 2>, scalar_prefetch = 0 : i64, scratch_operands = 0 : i64, tpu.core_type = #tpu.core_type<tc>, window_params = [{transform_indices = @transform_0, window_bounds = array<i64: 1, 8, 256>}, {pipeline_mode = #tpu.pipeline_mode<synchronous>, transform_indices = @transform_1, window_bounds = array<i64: 8, 1>}, {pipeline_mode = #tpu.pipeline_mode<synchronous>, transform_indices = @transform_2, window_bounds = array<i64: 8, 1>}, {pipeline_mode = #tpu.pipeline_mode<synchronous>, transform_indices = @transform_3, window_bounds = array<i64: 8, 72>}, {pipeline_mode = #tpu.pipeline_mode<synchronous>, transform_indices = @transform_4, window_bounds = array<i64: 8, 1>}, {transform_indices = @transform_5, window_bounds = array<i64: 1, 8, 256>}, {transform_indices = @transform_6, window_bounds = array<i64: 1, 8, 1>}, {transform_indices = @transform_7, window_bounds = array<i64: 1, 8, 1>}]} {
    %c0 = arith.constant 0 : index
    %c0_0 = arith.constant 0 : index
    %c0_1 = arith.constant 0 : index
    %0 = vector.load %arg1[%c0, %c0_0, %c0_1] : memref<1x8x256xf32, #tpu.memory_space<vmem>>, vector<1x8x256xf32>
    %1 = vector.shape_cast %0 : vector<1x8x256xf32> to vector<8x256xf32>
    %c0_2 = arith.constant 0 : index
    %c0_3 = arith.constant 0 : index
    %2 = vector.load %arg2[%c0_2, %c0_3] : memref<8x1xf32, #tpu.memory_space<vmem>>, vector<8x1xf32>
    %3 = vector.broadcast %2 : vector<8x1xf32> to vector<8x256xf32>
    %4 = arith.mulf %1, %3 : vector<8x256xf32>
    %c0_4 = arith.constant 0 : index
    %c0_5 = arith.constant 0 : index
    %5 = vector.load %arg3[%c0_4, %c0_5] : memref<8x1xf32, #tpu.memory_space<vmem>>, vector<8x1xf32>
    %6 = vector.broadcast %5 : vector<8x1xf32> to vector<8x256xf32>
    %7 = arith.addf %4, %6 : vector<8x256xf32>
    %cst = arith.constant 0.000000e+00 : f32
    %8 = vector.broadcast %cst : f32 to vector<8x256xf32>
    %9 = arith.maximumf %7, %8 : vector<8x256xf32>
    %cst_6 = arith.constant 0.000000e+00 : f32
    %10 = vector.broadcast %cst_6 : f32 to vector<8x17xf32>
    %11 = tpu.concatenate %10, %9, %10 in 1 : vector<8x17xf32>, vector<8x256xf32>, vector<8x17xf32> -> vector<8x290xf32>
    %12 = tpu.iota {dimensions = array<i32: 1>} : vector<8x256xi32>
    %c16_i32 = arith.constant 16 : i32
    %c0_i32 = arith.constant 0 : i32
    %13 = arith.cmpi eq, %c16_i32, %c0_i32 : i32
    %c1_i32 = arith.constant 1 : i32
    %14 = arith.select %13, %c1_i32, %c16_i32 : i32
    %15 = vector.broadcast %14 : i32 to vector<8x256xi32>
    %16 = arith.remsi %12, %15 : vector<8x256xi32>
    %c0_i32_7 = arith.constant 0 : i32
    %17 = vector.broadcast %c0_i32_7 : i32 to vector<8x256xi32>
    %18 = arith.cmpi ne, %16, %17 : vector<8x256xi32>
    %c0_i32_8 = arith.constant 0 : i32
    %19 = vector.broadcast %c0_i32_8 : i32 to vector<8x256xi32>
    %20 = arith.cmpi slt, %16, %19 : vector<8x256xi32>
    %c0_i32_9 = arith.constant 0 : i32
    %21 = arith.cmpi slt, %14, %c0_i32_9 : i32
    %22 = vector.broadcast %21 : i1 to vector<8x256xi1>
    %23 = vector.broadcast %22 : vector<8x256xi1> to vector<8x256xi1>
    %24 = arith.xori %20, %23 : vector<8x256xi1>
    %25 = arith.andi %24, %18 : vector<8x256xi1>
    %26 = vector.broadcast %14 : i32 to vector<8x256xi32>
    %27 = arith.addi %16, %26 : vector<8x256xi32>
    %28 = arith.select %25, %27, %16 : vector<8x256xi1>, vector<8x256xi32>
    %c1_i32_10 = arith.constant 1 : i32
    %29 = vector.broadcast %c1_i32_10 : i32 to vector<8x256xi32>
    %30 = arith.cmpi sge, %28, %29 : vector<8x256xi32>
    %c14_i32 = arith.constant 14 : i32
    %31 = vector.broadcast %c14_i32 : i32 to vector<8x256xi32>
    %32 = arith.cmpi sle, %28, %31 : vector<8x256xi32>
    %33 = vector.extract_strided_slice %11 {offsets = [0, 0], sizes = [8, 256], strides = [1, 1]} : vector<8x290xf32> to vector<8x256xf32>
    %cst_11 = arith.constant 0.000000e+00 : f32
    %34 = vector.broadcast %cst_11 : f32 to vector<8x256xf32>
    %35 = arith.select %30, %33, %34 : vector<8x256xi1>, vector<8x256xf32>
    %36 = vector.extract_strided_slice %11 {offsets = [0, 1], sizes = [8, 256], strides = [1, 1]} : vector<8x290xf32> to vector<8x256xf32>
    %37 = vector.extract_strided_slice %11 {offsets = [0, 2], sizes = [8, 256], strides = [1, 1]} : vector<8x290xf32> to vector<8x256xf32>
    %cst_12 = arith.constant 0.000000e+00 : f32
    %38 = vector.broadcast %cst_12 : f32 to vector<8x256xf32>
    %39 = arith.select %32, %37, %38 : vector<8x256xi1>, vector<8x256xf32>
    %40 = vector.extract_strided_slice %11 {offsets = [0, 16], sizes = [8, 256], strides = [1, 1]} : vector<8x290xf32> to vector<8x256xf32>
    %cst_13 = arith.constant 0.000000e+00 : f32
    %41 = vector.broadcast %cst_13 : f32 to vector<8x256xf32>
    %42 = arith.select %30, %40, %41 : vector<8x256xi1>, vector<8x256xf32>
    %43 = vector.extract_strided_slice %11 {offsets = [0, 17], sizes = [8, 256], strides = [1, 1]} : vector<8x290xf32> to vector<8x256xf32>
    %44 = vector.extract_strided_slice %11 {offsets = [0, 18], sizes = [8, 256], strides = [1, 1]} : vector<8x290xf32> to vector<8x256xf32>
    %cst_14 = arith.constant 0.000000e+00 : f32
    %45 = vector.broadcast %cst_14 : f32 to vector<8x256xf32>
    %46 = arith.select %32, %44, %45 : vector<8x256xi1>, vector<8x256xf32>
    %47 = vector.extract_strided_slice %11 {offsets = [0, 32], sizes = [8, 256], strides = [1, 1]} : vector<8x290xf32> to vector<8x256xf32>
    %cst_15 = arith.constant 0.000000e+00 : f32
    %48 = vector.broadcast %cst_15 : f32 to vector<8x256xf32>
    %49 = arith.select %30, %47, %48 : vector<8x256xi1>, vector<8x256xf32>
    %50 = vector.extract_strided_slice %11 {offsets = [0, 33], sizes = [8, 256], strides = [1, 1]} : vector<8x290xf32> to vector<8x256xf32>
    %51 = vector.extract_strided_slice %11 {offsets = [0, 34], sizes = [8, 256], strides = [1, 1]} : vector<8x290xf32> to vector<8x256xf32>
    %cst_16 = arith.constant 0.000000e+00 : f32
    %52 = vector.broadcast %cst_16 : f32 to vector<8x256xf32>
    %53 = arith.select %32, %51, %52 : vector<8x256xi1>, vector<8x256xf32>
    %54 = tpu.concatenate %35, %36, %39, %42, %43, %46, %49, %50, %53 in 0 : vector<8x256xf32>, vector<8x256xf32>, vector<8x256xf32>, vector<8x256xf32>, vector<8x256xf32>, vector<8x256xf32>, vector<8x256xf32>, vector<8x256xf32>, vector<8x256xf32> -> vector<72x256xf32>
    %55 = arith.truncf %54 : vector<72x256xf32> to vector<72x256xbf16>
    %c0_17 = arith.constant 0 : index
    %c0_18 = arith.constant 0 : index
    %56 = vector.load %arg4[%c0_17, %c0_18] : memref<8x72xbf16, #tpu.memory_space<vmem>>, vector<8x72xbf16>
    %cst_19 = arith.constant dense<0.000000e+00> : vector<8x256xf32>
    %57 = tpu.matmul %56, %55, %cst_19 {dimension_numbers = #tpu.dot_dimension_numbers<[1], [0], [0], [1], [0, 0, 1, 1], [], []>} : vector<8x72xbf16>, vector<72x256xbf16>, vector<8x256xf32> -> vector<8x256xf32>
    %c0_20 = arith.constant 0 : index
    %c0_21 = arith.constant 0 : index
    %58 = vector.load %arg5[%c0_20, %c0_21] : memref<8x1xf32, #tpu.memory_space<vmem>>, vector<8x1xf32>
    %59 = vector.broadcast %58 : vector<8x1xf32> to vector<8x256xf32>
    %60 = arith.addf %57, %59 : vector<8x256xf32>
    %c0_22 = arith.constant 0 : index
    %c0_23 = arith.constant 0 : index
    %c0_24 = arith.constant 0 : index
    %61 = vector.load %arg6[%c0_22, %c0_23, %c0_24] : memref<1x8x256xf32, #tpu.memory_space<vmem>>, vector<1x8x256xf32>
    %62 = vector.shape_cast %61 : vector<1x8x256xf32> to vector<8x256xf32>
    %63 = vector.shape_cast %60 : vector<8x256xf32> to vector<1x8x256xf32>
    tpu.vector_store %arg6[%c0_22, %c0_23, %c0_24], %63 {strides = array<i32>} : memref<1x8x256xf32, #tpu.memory_space<vmem>>, vector<1x8x256xf32>,
    %cst_25 = arith.constant dense<0.000000e+00> : vector<8xf32>
    %64 = vector.multi_reduction <add>, %60, %cst_25 [1] : vector<8x256xf32> to vector<8xf32>
    %65 = vector.shape_cast %64 : vector<8xf32> to vector<8x1xf32>
    %cst_26 = arith.constant 3.906250e-03 : f32
    %66 = vector.broadcast %cst_26 : f32 to vector<8x1xf32>
    %67 = arith.mulf %65, %66 : vector<8x1xf32>
    %68 = vector.broadcast %67 : vector<8x1xf32> to vector<8x256xf32>
    %69 = arith.subf %60, %68 : vector<8x256xf32>
    %c0_27 = arith.constant 0 : index
    %c0_28 = arith.constant 0 : index
    %c0_29 = arith.constant 0 : index
    %70 = vector.load %arg7[%c0_27, %c0_28, %c0_29] : memref<1x8x1xf32, #tpu.memory_space<vmem>>, vector<1x8x1xf32>
    %71 = vector.shape_cast %70 : vector<1x8x1xf32> to vector<8x1xf32>
    %72 = vector.shape_cast %65 : vector<8x1xf32> to vector<1x8x1xf32>
    tpu.vector_store %arg7[%c0_27, %c0_28, %c0_29], %72 {strides = array<i32>} : memref<1x8x1xf32, #tpu.memory_space<vmem>>, vector<1x8x1xf32>,
    %73 = arith.mulf %69, %69 : vector<8x256xf32>
    %cst_30 = arith.constant dense<0.000000e+00> : vector<8xf32>
    %74 = vector.multi_reduction <add>, %73, %cst_30 [1] : vector<8x256xf32> to vector<8xf32>
    %75 = vector.shape_cast %74 : vector<8xf32> to vector<8x1xf32>
    %c0_31 = arith.constant 0 : index
    %c0_32 = arith.constant 0 : index
    %c0_33 = arith.constant 0 : index
    %76 = vector.load %arg8[%c0_31, %c0_32, %c0_33] : memref<1x8x1xf32, #tpu.memory_space<vmem>>, vector<1x8x1xf32>
    %77 = vector.shape_cast %76 : vector<1x8x1xf32> to vector<8x1xf32>
    %78 = vector.shape_cast %75 : vector<8x1xf32> to vector<1x8x1xf32>
    tpu.vector_store %arg8[%c0_31, %c0_32, %c0_33], %78 {strides = array<i32>} : memref<1x8x1xf32, #tpu.memory_space<vmem>>, vector<1x8x1xf32>,
    return
  }
  func.func @transform_0(%arg0: i32) -> (i32, i32, i32) {
    %c0_i32 = arith.constant 0 : i32
    %c0_i32_0 = arith.constant 0 : i32
    %c0_i32_1 = arith.constant 0 : i32
    return %arg0, %c0_i32, %c0_i32_0 : i32, i32, i32
  }
  func.func @transform_1(%arg0: i32) -> (i32, i32) {
    %c0_i32 = arith.constant 0 : i32
    %c0_i32_0 = arith.constant 0 : i32
    %c0_i32_1 = arith.constant 0 : i32
    return %c0_i32, %c0_i32_0 : i32, i32
  }
  func.func @transform_2(%arg0: i32) -> (i32, i32) {
    %c0_i32 = arith.constant 0 : i32
    %c0_i32_0 = arith.constant 0 : i32
    %c0_i32_1 = arith.constant 0 : i32
    return %c0_i32, %c0_i32_0 : i32, i32
  }
  func.func @transform_3(%arg0: i32) -> (i32, i32) {
    %c0_i32 = arith.constant 0 : i32
    %c0_i32_0 = arith.constant 0 : i32
    %c0_i32_1 = arith.constant 0 : i32
    return %c0_i32, %c0_i32_0 : i32, i32
  }
  func.func @transform_4(%arg0: i32) -> (i32, i32) {
    %c0_i32 = arith.constant 0 : i32
    %c0_i32_0 = arith.constant 0 : i32
    %c0_i32_1 = arith.constant 0 : i32
    return %c0_i32, %c0_i32_0 : i32, i32
  }
  func.func @transform_5(%arg0: i32) -> (i32, i32, i32) {
    %c0_i32 = arith.constant 0 : i32
    %c0_i32_0 = arith.constant 0 : i32
    %c0_i32_1 = arith.constant 0 : i32
    return %arg0, %c0_i32, %c0_i32_0 : i32, i32, i32
  }
  func.func @transform_6(%arg0: i32) -> (i32, i32, i32) {
    %c0_i32 = arith.constant 0 : i32
    %c0_i32_0 = arith.constant 0 : i32
    %c0_i32_1 = arith.constant 0 : i32
    return %arg0, %c0_i32, %c0_i32_0 : i32, i32, i32
  }
  func.func @transform_7(%arg0: i32) -> (i32, i32, i32) {
    %c0_i32 = arith.constant 0 : i32
    %c0_i32_0 = arith.constant 0 : i32
    %c0_i32_1 = arith.constant 0 : i32
    return %arg0, %c0_i32, %c0_i32_0 : i32, i32, i32
  }
}

</mosaic_0001>

<llo_original>
// kernel: encoder_block_forward.4
$region0: #{encoder_block_forward.4}
  #allocation0 [shape = 'u32[]', space=smem, size = 0x4, offset = 0x4, fixed_abs, tag = 'smem constant byte address 0x4 - core index']
  #allocation1 [shape = 'u32[144,128]{1,0:T(1,128)}', space=vmem, size = 0x12000, scoped, tag = 'internal scratch']
  %s0 = inlined_call_operand.vmem [shape: f32[2,8,256], index: 0, kind: input, shape index: {}]
  %s1 = inlined_call_operand.vmem [shape: f32[8,1], index: 1, kind: input, shape index: {}]
  %s2 = inlined_call_operand.vmem [shape: f32[8,1], index: 2, kind: input, shape index: {}]
  %s3 = inlined_call_operand.vmem [shape: bf16[8,72], index: 3, kind: input, shape index: {}]
  %s4 = inlined_call_operand.vmem [shape: f32[8,1], index: 4, kind: input, shape index: {}]
  %s5 = inlined_call_operand.vmem [shape: f32[2,8,256], index: 5, kind: output, shape index: {0}]
  %s6 = inlined_call_operand.vmem [shape: f32[2,8,1], index: 6, kind: output, shape index: {1}]
  %s7 = inlined_call_operand.vmem [shape: f32[2,8,1], index: 7, kind: output, shape index: {2}]
  %8 = xla_tuple %s5, %s6, %s7
  %s9 = sld [smem:[#allocation0]]
  $region69: #{encoder_block_forward.4} parent=0
    _
  %s11 = ssub.s32 1, %s9
  %s12 = scalar_select 0, %s11, %s9
  loop: start=0, step=1, limit=4
  $region2: #{encoder_block_forward.4} parent=0 // loop_pre_header
    _
  $region3: #{encoder_block_forward.4} parent=0 // loop_header
    %s14 = sphi 0, %s18
    %p15 = scmp.ge.s32.totalorder %s14, 4
    %s24 = sphi 0, %s26
    %s27 = sphi 0, %s24
    %s28 = sphi 0, %s27
    %s44 = sphi 0, %s28
    %s48 = sphi 0, %s48
    %s50 = sphi 0, %s48
    %s51 = sphi 0, %s50
    %s65 = sphi 0, %s51
    %s69 = sphi 0, %s69
    %s71 = sphi 0, %s69
    %s72 = sphi 0, %s71
    %s86 = sphi 0, %s72
    %s90 = sphi 0, %s90
    %s92 = sphi 0, %s90
    %s93 = sphi 0, %s92
    %s107 = sphi 0, %s93
    %s111 = sphi 0, %s111
    %s113 = sphi 0, %s111
    %s114 = sphi 0, %s113
    %s128 = sphi 0, %s114
    %s134 = sphi 0, %s136
    %s137 = sphi 0, %s134
    %s138 = sphi 0, %s137
    %s154 = sphi 0, %s138
    %s160 = sphi 0, %s162
    %s163 = sphi 0, %s160
    %s164 = sphi 0, %s163
    %s180 = sphi 0, %s164
    %s186 = sphi 0, %s188
    %s189 = sphi 0, %s186
    %s190 = sphi 0, %s189
    %s206 = sphi 0, %s190
  $region4: #{encoder_block_forward.4} parent=0 // loop_header_branch
    %17 = sbr.rel (%p15) target = $region8
  $region5: #{encoder_block_forward.4} parent=0 // loop_body
    %s19 = ssub.s32 %s14, 1
    %s20 = ssub.s32 %s14, 2
    %s21 = sadd.s32 %s14, 1
    %s22 = ssub.s32 %s14, %s21
    %p23 = scmp.eq.s32.totalorder %s22, 0
    %s25 = sadd.s32 %s24, 1
    %s26 = scalar_select %p23, %s24, %s25
    %p29 = pneg %p23
    %p30 = scmp.eq.s32.totalorder %s14, 1
    %p31 = por %p29, %p30
    %p32 = scmp.ne.s32.totalorder %s24, %s27
    %p33 = scmp.eq.s32.totalorder %s14, 0
    %p34 = por %p32, %p33
    %p35 = scmp.ne.s32.totalorder %s24, %s27
    %p36 = scmp.eq.s32.totalorder %s19, 1
    %p37 = por %p35, %p36
    %p38 = scmp.ne.s32.totalorder %s27, %s28
    %p39 = scmp.eq.s32.totalorder %s19, 0
    %p40 = por %p38, %p39
    %p41 = scmp.ne.s32.totalorder %s27, %s28
    %p42 = scmp.eq.s32.totalorder %s20, 1
    %p43 = por %p41, %p42
    %p45 = scmp.ne.s32.totalorder %s28, %s44
    %p46 = scmp.eq.s32.totalorder %s20, 0
    %p47 = por %p45, %p46
    %s49 = sadd.s32 %s48, 1
    %p52 = scmp.eq.s32.totalorder %s14, 1
    %p53 = scmp.ne.s32.totalorder %s48, %s50
    %p54 = scmp.eq.s32.totalorder %s14, 0
    %p55 = por %p53, %p54
    %p56 = scmp.ne.s32.totalorder %s48, %s50
    %p57 = scmp.eq.s32.totalorder %s19, 1
    %p58 = por %p56, %p57
    %p59 = scmp.ne.s32.totalorder %s50, %s51
    %p60 = scmp.eq.s32.totalorder %s19, 0
    %p61 = por %p59, %p60
    %p62 = scmp.ne.s32.totalorder %s50, %s51
    %p63 = scmp.eq.s32.totalorder %s20, 1
    %p64 = por %p62, %p63
    %p66 = scmp.ne.s32.totalorder %s51, %s65
    %p67 = scmp.eq.s32.totalorder %s20, 0
    %p68 = por %p66, %p67
    %s70 = sadd.s32 %s69, 1
    %p73 = scmp.eq.s32.totalorder %s14, 1
    %p74 = scmp.ne.s32.totalorder %s69, %s71
    %p75 = scmp.eq.s32.totalorder %s14, 0
    %p76 = por %p74, %p75
    %p77 = scmp.ne.s32.totalorder %s69, %s71
    %p78 = scmp.eq.s32.totalorder %s19, 1
    %p79 = por %p77, %p78
    %p80 = scmp.ne.s32.totalorder %s71, %s72
    %p81 = scmp.eq.s32.totalorder %s19, 0
    %p82 = por %p80, %p81
    %p83 = scmp.ne.s32.totalorder %s71, %s72
    %p84 = scmp.eq.s32.totalorder %s20, 1
    %p85 = por %p83, %p84
    %p87 = scmp.ne.s32.totalorder %s72, %s86
    %p88 = scmp.eq.s32.totalorder %s20, 0
    %p89 = por %p87, %p88
    %s91 = sadd.s32 %s90, 1
    %p94 = scmp.eq.s32.totalorder %s14, 1
    %p95 = scmp.ne.s32.totalorder %s90, %s92
    %p96 = scmp.eq.s32.totalorder %s14, 0
    %p97 = por %p95, %p96
    %p98 = scmp.ne.s32.totalorder %s90, %s92
    %p99 = scmp.eq.s32.totalorder %s19, 1
    %p100 = por %p98, %p99
    %p101 = scmp.ne.s32.totalorder %s92, %s93
    %p102 = scmp.eq.s32.totalorder %s19, 0
    %p103 = por %p101, %p102
    %p104 = scmp.ne.s32.totalorder %s92, %s93
    %p105 = scmp.eq.s32.totalorder %s20, 1
    %p106 = por %p104, %p105
    %p108 = scmp.ne.s32.totalorder %s93, %s107
    %p109 = scmp.eq.s32.totalorder %s20, 0
    %p110 = por %p108, %p109
    %s112 = sadd.s32 %s111, 1
    %p115 = scmp.eq.s32.totalorder %s14, 1
    %p116 = scmp.ne.s32.totalorder %s111, %s113
    %p117 = scmp.eq.s32.totalorder %s14, 0
    %p118 = por %p116, %p117
    %p119 = scmp.ne.s32.totalorder %s111, %s113
    %p120 = scmp.eq.s32.totalorder %s19, 1
    %p121 = por %p119, %p120
    %p122 = scmp.ne.s32.totalorder %s113, %s114
    %p123 = scmp.eq.s32.totalorder %s19, 0
    %p124 = por %p122, %p123
    %p125 = scmp.ne.s32.totalorder %s113, %s114
    %p126 = scmp.eq.s32.totalorder %s20, 1
    %p127 = por %p125, %p126
    %p129 = scmp.ne.s32.totalorder %s114, %s128
    %p130 = scmp.eq.s32.totalorder %s20, 0
    %p131 = por %p129, %p130
    %s132 = ssub.s32 %s14, %s21
    %p133 = scmp.eq.s32.totalorder %s132, 0
    %s135 = sadd.s32 %s134, 1
    %s136 = scalar_select %p133, %s134, %s135
    %p139 = pneg %p133
    %p140 = scmp.eq.s32.totalorder %s14, 1
    %p141 = por %p139, %p140
    %p142 = scmp.ne.s32.totalorder %s134, %s137
    %p143 = scmp.eq.s32.totalorder %s14, 0
    %p144 = por %p142, %p143
    %p145 = scmp.ne.s32.totalorder %s134, %s137
    %p146 = scmp.eq.s32.totalorder %s19, 1
    %p147 = por %p145, %p146
    %p148 = scmp.ne.s32.totalorder %s137, %s138
    %p149 = scmp.eq.s32.totalorder %s19, 0
    %p150 = por %p148, %p149
    %p151 = scmp.ne.s32.totalorder %s137, %s138
    %p152 = scmp.eq.s32.totalorder %s20, 1
    %p153 = por %p151, %p152
    %p155 = scmp.ne.s32.totalorder %s138, %s154
    %p156 = scmp.eq.s32.totalorder %s20, 0
    %p157 = por %p155, %p156
    %s158 = ssub.s32 %s14, %s21
    %p159 = scmp.eq.s32.totalorder %s158, 0
    %s161 = sadd.s32 %s160, 1
    %s162 = scalar_select %p159, %s160, %s161
    %p165 = pneg %p159
    %p166 = scmp.eq.s32.totalorder %s14, 1
    %p167 = por %p165, %p166
    %p168 = scmp.ne.s32.totalorder %s160, %s163
    %p169 = scmp.eq.s32.totalorder %s14, 0
    %p170 = por %p168, %p169
    %p171 = scmp.ne.s32.totalorder %s160, %s163
    %p172 = scmp.eq.s32.totalorder %s19, 1
    %p173 = por %p171, %p172
    %p174 = scmp.ne.s32.totalorder %s163, %s164
    %p175 = scmp.eq.s32.totalorder %s19, 0
    %p176 = por %p174, %p175
    %p177 = scmp.ne.s32.totalorder %s163, %s164
    %p178 = scmp.eq.s32.totalorder %s20, 1
    %p179 = por %p177, %p178
    %p181 = scmp.ne.s32.totalorder %s164, %s180
    %p182 = scmp.eq.s32.totalorder %s20, 0
    %p183 = por %p181, %p182
    %s184 = ssub.s32 %s14, %s21
    %p185 = scmp.eq.s32.totalorder %s184, 0
    %s187 = sadd.s32 %s186, 1
    %s188 = scalar_select %p185, %s186, %s187
    %p191 = pneg %p185
    %p192 = scmp.eq.s32.totalorder %s14, 1
    %p193 = por %p191, %p192
    %p194 = scmp.ne.s32.totalorder %s186, %s189
    %p195 = scmp.eq.s32.totalorder %s14, 0
    %p196 = por %p194, %p195
    %p197 = scmp.ne.s32.totalorder %s186, %s189
    %p198 = scmp.eq.s32.totalorder %s19, 1
    %p199 = por %p197, %p198
    %p200 = scmp.ne.s32.totalorder %s189, %s190
    %p201 = scmp.eq.s32.totalorder %s19, 0
    %p202 = por %p200, %p201
    %p203 = scmp.ne.s32.totalorder %s189, %s190
    %p204 = scmp.eq.s32.totalorder %s20, 1
    %p205 = por %p203, %p204
    %p207 = scmp.ne.s32.totalorder %s190, %s206
    %p208 = scmp.eq.s32.totalorder %s20, 0
    %p209 = por %p207, %p208
    %p210 = scmp.le.s32.totalorder 1, %s14
    %p211 = scmp.lt.s32.totalorder %s14, 3
    %p212 = pnand %p210, %p211
    %p213 = pneg %p212
    // Predicated region
    $region9: #{encoder_block_forward.4} parent=5 // pred_check
      _
    $region10: #{encoder_block_forward.4} parent=5 // pred_check_branch
      %215 = sbr.rel (%p212) target = $region12
    $region11: #{encoder_block_forward.4} parent=5 // pred_region
      %s216 = ssub.s32 %s14, 1
      // Predicated region
      $region13: #{encoder_block_forward.4} parent=11 // pred_check
        %p217 = pneg %p61
      $region14: #{encoder_block_forward.4} parent=11 // pred_check_branch
        %219 = sbr.rel (%p217) target = $region16
      $region15: #{encoder_block_forward.4} parent=11 // pred_region
        _
      $region16: #{encoder_block_forward.4} parent=11 // pred_fallthru
        _
      // Predicated region
      $region17: #{encoder_block_forward.4} parent=11 // pred_check
        %p220 = pneg %p82
      $region18: #{encoder_block_forward.4} parent=11 // pred_check_branch
        %222 = sbr.rel (%p220) target = $region20
      $region19: #{encoder_block_forward.4} parent=11 // pred_region
        _
      $region20: #{encoder_block_forward.4} parent=11 // pred_fallthru
        _
      // Predicated region
      $region21: #{encoder_block_forward.4} parent=11 // pred_check
        %p223 = pneg %p103
      $region22: #{encoder_block_forward.4} parent=11 // pred_check_branch
        %225 = sbr.rel (%p223) target = $region24
      $region23: #{encoder_block_forward.4} parent=11 // pred_region
        _
      $region24: #{encoder_block_forward.4} parent=11 // pred_fallthru
        _
      // Predicated region
      $region25: #{encoder_block_forward.4} parent=11 // pred_check
        %p226 = pneg %p124
      $region26: #{encoder_block_forward.4} parent=11 // pred_check_branch
        %228 = sbr.rel (%p226) target = $region28
      $region27: #{encoder_block_forward.4} parent=11 // pred_region
        _
      $region28: #{encoder_block_forward.4} parent=11 // pred_fallthru
        _
    $region12: #{encoder_block_forward.4} parent=5 // pred_fallthru
      _
    %p229 = scmp.lt.s32.totalorder %s14, 2
    // Predicated region
    $region29: #{encoder_block_forward.4} parent=5 // pred_check
      %p230 = pneg %p229
    $region30: #{encoder_block_forward.4} parent=5 // pred_check_branch
      %232 = sbr.rel (%p230) target = $region32
    $region31: #{encoder_block_forward.4} parent=5 // pred_region
      // Predicated region
      $region33: #{encoder_block_forward.4} parent=31 // pred_check
        %p233 = pneg %p34
      $region34: #{encoder_block_forward.4} parent=31 // pred_check_branch
        %235 = sbr.rel (%p233) target = $region36
      $region35: #{encoder_block_forward.4} parent=31 // pred_region
        %p236 = scmp.lt.s32.totalorder %s14, 1
        %s237 = scalar_select %p236, %s14, 1
        %s238 = smul.addr %s237, 2
        %s239 = smul.addr %s238, 8
        %s240 = scalar_lea.vmem %s0, %s239
      $region36: #{encoder_block_forward.4} parent=31 // pred_fallthru
        _
    $region32: #{encoder_block_forward.4} parent=5 // pred_fallthru
      _
    %p241 = scmp.le.s32.totalorder 1, %s14
    %p242 = scmp.lt.s32.totalorder %s14, 3
    %p243 = pnand %p241, %p242
    %p244 = pneg %p243
    // Predicated region
    $region37: #{encoder_block_forward.4} parent=5 // pred_check
      _
    $region38: #{encoder_block_forward.4} parent=5 // pred_check_branch
      %246 = sbr.rel (%p243) target = $region40
    $region39: #{encoder_block_forward.4} parent=5 // pred_region
      %s247 = ssub.s32 %s14, 1
      %p248 = scmp.lt.s32.totalorder %s19, 1
      %s249 = scalar_select %p248, %s19, 1
      %s250 = smul.addr %s249, 2
      %s251 = smul.addr %s250, 8
      %s252 = scalar_lea.vmem %s0, %s251
      %p253 = pneg %p40
      %p254 = pneg %p37
      %p255 = pneg %p61
      %p256 = pneg %p58
      %p257 = pneg %p82
      %p258 = pneg %p79
      %p259 = pneg %p103
      %p260 = pneg %p100
      %p261 = pneg %p124
      %p262 = pneg %p121
      %p263 = pneg %p150
      %p264 = pneg %p147
      %p265 = scmp.lt.s32.totalorder %s19, 1
      %s266 = scalar_select %p265, %s19, 1
      %s267 = smul.addr %s266, 2
      %s268 = smul.addr %s267, 8
      %s269 = scalar_lea.vmem %s5, %s268
      %p270 = pneg %p176
      %p271 = pneg %p173
      %p272 = scmp.lt.s32.totalorder %s19, 1
      %s273 = scalar_select %p272, %s19, 1
      %s274 = smul.addr %s273, 8
      %s275 = scalar_lea.vmem %s6, %s274
      %p276 = pneg %p202
      %p277 = pneg %p199
      %p278 = scmp.lt.s32.totalorder %s19, 1
      %s279 = scalar_select %p278, %s19, 1
      %s280 = smul.addr %s279, 8
      %s281 = scalar_lea.vmem %s7, %s280
      %p282 = scmp.lt.s32.totalorder %s19, 1
      %s283 = scalar_select %p282, %s19, 1
      %s284 = smul.addr %s283, 2
      %s285 = smul.addr %s284, 8
      %s286 = scalar_lea.vmem %s0, %s285
      %p287 = scmp.lt.s32.totalorder %s19, 1
      %s288 = scalar_select %p287, %s19, 1
      %s289 = smul.addr %s288, 2
      %s290 = smul.addr %s289, 8
      %s291 = scalar_lea.vmem %s5, %s290
      %p292 = scmp.lt.s32.totalorder %s19, 1
      %s293 = scalar_select %p292, %s19, 1
      %s294 = smul.addr %s293, 8
      %s295 = scalar_lea.vmem %s6, %s294
      %p296 = scmp.lt.s32.totalorder %s19, 1
      %s297 = scalar_select %p296, %s19, 1
      %s298 = smul.addr %s297, 8
      %s299 = scalar_lea.vmem %s7, %s298
      %v301 = vld [vmem:[%s286] sm:$0xff]
      %v302 = vld [vmem:[%s286 + $0x8] sm:$0xff]
      %v303 = vld [vmem:[%s1] sm:$0xff]
      %305 = vset.pattern.permute.xlu0 0
      %306 = vperm.xlu0 %305, %v303
      %v307 = vpop.permute.xlu0 %306
      %v309 = vmul.f32 %v301, %v307
      %v310 = vmul.f32 %v302, %v307
      %v311 = vld [vmem:[%s2] sm:$0xff]
      %313 = vset.pattern.permute.xlu0 0
      %314 = vperm.xlu0 %313, %v311
      %v315 = vpop.permute.xlu0 %314
      %v317 = vadd.f32 %v309, %v315
      %v318 = vadd.f32 %v310, %v315
      %v319 = vmax.f32 %v317, 0.0
      %v320 = vmax.f32 %v318, 0.0
      %323 = vrot.lane.b32.xlu0 %v319, 17
      %v324 = vpop.permute.xlu0 %323
      %325 = vrot.lane.b32.xlu0 %v320, 17
      %v326 = vpop.permute.xlu0 %325
      %vm327 = vcmask 138240
      %v328 = vsel %vm327, %v324, %v326
      %v332 = vsel %vm327, 0.0, %v324
      %v333 = vsel %vm327, %v326, 0.0
      %v334 = vlaneseq
      %v335 = vand.u32 %v334, 127
      %v336 = vadd.s32 %v335, 128
      %vm337 = vcmp.lt.s32.totalorder %v335, 0
      %v338 = vsub.s32 0, %v335
      %v339 = vsel %vm337, %v338, %v335
      %v340 = vshrl.u32 %v339, 4
      %v341 = vand.u32 %v339, 15
      %v342 = vsub.s32 0, %v341
      %v343 = vsel %vm337, %v342, %v341
      %vm344 = vcmp.lt.s32.totalorder %v336, 0
      %v345 = vsub.s32 0, %v336
      %v346 = vsel %vm344, %v345, %v336
      %v347 = vshrl.u32 %v346, 4
      %v348 = vand.u32 %v346, 15
      %v349 = vsub.s32 0, %v348
      %v350 = vsel %vm344, %v349, %v348
      %vm351 = vcmp.ne.s32.totalorder %v343, 0
      %vm352 = vcmp.ne.s32.totalorder %v350, 0
      %vm353 = vcmp.lt.s32.totalorder %v343, 0
      %vm354 = vcmp.lt.s32.totalorder %v350, 0
      %vm355 = vmand %vm353, %vm351
      %vm356 = vmand %vm354, %vm352
      %v357 = vadd.s32 %v343, 16
      %v358 = vadd.s32 %v350, 16
      %v359 = vsel %vm355, %v357, %v343
      %v360 = vsel %vm356, %v358, %v350
      %vm361 = vcmp.ge.s32.totalorder %v359, 1
      %vm362 = vcmp.ge.s32.totalorder %v360, 1
      %vm363 = vcmp.le.s32.totalorder %v359, 14
      %vm364 = vcmp.le.s32.totalorder %v360, 14
      %v365 = vsel %vm361, %v332, 0.0
      %v366 = vsel %vm362, %v328, 0.0
      %369 = vrot.lane.b32.xlu0 %v332, 126
      %v370 = vpop.permute.xlu0 %369
      %371 = vrot.lane.b32.xlu0 %v328, 126
      %v372 = vpop.permute.xlu0 %371
      %373 = vrot.lane.b32.xlu0 %v333, 126
      %v374 = vpop.permute.xlu0 %373
      %vm375 = vcmask 1031168
      %v376 = vsel %vm375, %v370, %v372
      %v377 = vsel %vm375, %v372, %v374
      %v380 = vsel %vm363, %v376, 0.0
      %v381 = vsel %vm364, %v377, 0.0
      %382 = vrot.lane.b32.xlu0 %v332, 112
      %v383 = vpop.permute.xlu0 %382
      %384 = vrot.lane.b32.xlu0 %v328, 112
      %v385 = vpop.permute.xlu0 %384
      %386 = vrot.lane.b32.xlu0 %v333, 112
      %v387 = vpop.permute.xlu0 %386
      %vm388 = vcmask 916480
      %v389 = vsel %vm388, %v383, %v385
      %v390 = vsel %vm388, %v385, %v387
      %v393 = vsel %vm361, %v389, 0.0
      %v394 = vsel %vm362, %v390, 0.0
      %395 = vrot.lane.b32.xlu0 %v332, 110
      %v396 = vpop.permute.xlu0 %395
      %397 = vrot.lane.b32.xlu0 %v328, 110
      %v398 = vpop.permute.xlu0 %397
      %399 = vrot.lane.b32.xlu0 %v333, 110
      %v400 = vpop.permute.xlu0 %399
      %vm401 = vcmask 900096
      %v402 = vsel %vm401, %v396, %v398
      %v403 = vsel %vm401, %v398, %v400
      %v406 = vsel %vm363, %v402, 0.0
      %v407 = vsel %vm364, %v403, 0.0
      %408 = vrot.lane.b32.xlu0 %v332, 96
      %v409 = vpop.permute.xlu0 %408
      %410 = vrot.lane.b32.xlu0 %v328, 96
      %v411 = vpop.permute.xlu0 %410
      %412 = vrot.lane.b32.xlu0 %v333, 96
      %v413 = vpop.permute.xlu0 %412
      %vm414 = vcmask 785408
      %v415 = vsel %vm414, %v409, %v411
      %v416 = vsel %vm414, %v411, %v413
      %v419 = vsel %vm361, %v415, 0.0
      %v420 = vsel %vm362, %v416, 0.0
      %421 = vrot.lane.b32.xlu0 %v332, 94
      %v422 = vpop.permute.xlu0 %421
      %423 = vrot.lane.b32.xlu0 %v328, 94
      %v424 = vpop.permute.xlu0 %423
      %425 = vrot.lane.b32.xlu0 %v333, 94
      %v426 = vpop.permute.xlu0 %425
      %vm427 = vcmask 769024
      %v428 = vsel %vm427, %v422, %v424
      %v429 = vsel %vm427, %v424, %v426
      %v432 = vsel %vm363, %v428, 0.0
      %v433 = vsel %vm364, %v429, 0.0
      %434 = vrot.lane.b32.xlu0 %v332, 127
      %v435 = vpop.permute.xlu0 %434
      %436 = vrot.lane.b32.xlu0 %v328, 127
      %v437 = vpop.permute.xlu0 %436
      %438 = vrot.lane.b32.xlu0 %v333, 127
      %v439 = vpop.permute.xlu0 %438
      %vm440 = vcmask 1039360
      %v441 = vsel %vm440, %v435, %v437
      %v442 = vsel %vm440, %v437, %v439
      %445 = vrot.lane.b32.xlu0 %v332, 111
      %v446 = vpop.permute.xlu0 %445
      %447 = vrot.lane.b32.xlu0 %v328, 111
      %v448 = vpop.permute.xlu0 %447
      %449 = vrot.lane.b32.xlu0 %v333, 111
      %v450 = vpop.permute.xlu0 %449
      %vm451 = vcmask 908288
      %v452 = vsel %vm451, %v446, %v448
      %v453 = vsel %vm451, %v448, %v450
      %456 = vrot.lane.b32.xlu0 %v332, 95
      %v457 = vpop.permute.xlu0 %456
      %458 = vrot.lane.b32.xlu0 %v328, 95
      %v459 = vpop.permute.xlu0 %458
      %460 = vrot.lane.b32.xlu0 %v333, 95
      %v461 = vpop.permute.xlu0 %460
      %vm462 = vcmask 777216
      %v463 = vsel %vm462, %v457, %v459
      %v464 = vsel %vm462, %v459, %v461
      %v467 = vpack.c.bf16 %v441, %v365
      %v468 = vpack.c.bf16 %v442, %v366
      %v469 = vpack.c.bf16 %v393, %v380
      %v470 = vpack.c.bf16 %v394, %v381
      %v471 = vpack.c.bf16 %v406, %v452
      %v472 = vpack.c.bf16 %v407, %v453
      %v473 = vpack.c.bf16 %v463, %v419
      %v474 = vpack.c.bf16 %v464, %v420
      %v475 = vpack.c.bf16 %v432, %v432
      %v476 = vpack.c.bf16 %v433, %v433
      %v477 = vld [vmem:[%s3] sm:$0xf]
      %v478 = vld [vmem:[%s4] sm:$0xff]
      %480 = vset.pattern.permute.xlu0 0
      %481 = vperm.xlu0 %480, %v478
      %v482 = vpop.permute.xlu0 %481
      %vm484 = vcmask 588800
      %v486 = vsel %vm484, %v477, 0
      %vm488 = vcmask 1043456
      %v490 = vsel %vm488, %v475, 0
      %v493 = vsel %vm488, %v476, 0
      %495 = vmatprep.subr.bf16.mxu0 0
      %496 = vmatpush1.bf16.msra.mxu0 0
      %497 = vmatprep.subr.bf16.mxu0 0
      %498 = vmatpush1.bf16.msra.mxu0 0
      %499 = vmatprep.subr.bf16.mxu0 0
      %500 = vmatpush1.bf16.msra.mxu0 0
      %501 = vmatprep.subr.bf16.mxu0 %v493
      %502 = vmatpush1.bf16.msra.mxu0 %v490
      %503 = vmatprep.subr.bf16.mxu0 %v474
      %504 = vmatpush1.bf16.msra.mxu0 %v473
      %505 = vmatprep.subr.bf16.mxu0 %v472
      %506 = vmatpush1.bf16.msra.mxu0 %v471
      %507 = vmatprep.subr.bf16.mxu0 %v470
      %508 = vmatpush1.bf16.msra.mxu0 %v469
      %509 = vmatprep.subr.bf16.mxu0 %v468
      %510 = vmatpush1.bf16.msra.mxu0 %v467
      %511 = vmatprep.subr.bf16.mxu0 0
      %512 = vmatpush2.bf16.msra.mxu0 0
      %513 = vmatprep.subr.bf16.mxu0 0
      %514 = vmatpush2.bf16.msra.mxu0 0
      %515 = vmatprep.subr.bf16.mxu0 0
      %516 = vmatpush2.bf16.msra.mxu0 0
      %517 = vmatprep.subr.bf16.mxu0 0
      %518 = vmatpush2.bf16.msra.mxu0 0
      %519 = vmatprep.subr.bf16.mxu0 0
      %520 = vmatpush2.bf16.msra.mxu0 0
      %521 = vmatprep.subr.bf16.mxu0 0
      %522 = vmatpush2.bf16.msra.mxu0 0
      %523 = vmatprep.subr.bf16.mxu0 0
      %524 = vmatpush2.bf16.msra.mxu0 0
      %525 = vmatprep.subr.bf16.mxu0 0
      %526 = vmatpush2.bf16.msra.mxu0 0
      %527 = vmatprep.mubr.bf16.mxu0 0
      %528 = vmatmul.mubr.bf16.gmra.mxu0 %v486
      %v529 = vpop.f32.mrf.mxu0
      %v530 = vadd.f32 %v482, %v529
      %v531 = vpop.f32.mrf.mxu0
      %v532 = vadd.f32 %v482, %v531
      %v533 = vpop.f32.mrf.mxu0
      %v534 = vpop.f32.mrf.mxu0
      %535 = vdwg.mxu0
      %536 = vst [vmem:[%s291] sm:$0xff] %v530
      %537 = vst [vmem:[%s291 + $0x8] sm:$0xff] %v532
      %v538 = vadd.f32 %v530, %v532
      %539 = vadd.xlane.f32.xlu0 %v538
      %v540 = vpop.xlane.xlu0 %539
      %v541 = vmul.f32 %v540, 0.00390625
      %v542 = vsub.f32 %v530, %v541
      %v543 = vsub.f32 %v532, %v541
      %vm544 = vcmask 7168
      %545 = vst.msk [vmem:[%s295] sm:$0xff] %vm544, %v540
      %v546 = vmul.f32 %v542, %v542
      %v547 = vmul.f32 %v543, %v543
      %v548 = vadd.f32 %v546, %v547
      %549 = vadd.xlane.f32.xlu0 %v548
      %v550 = vpop.xlane.xlu0 %549
      %551 = vst.msk [vmem:[%s299] sm:$0xff] %vm544, %v550
      %p552 = scmp.lt.s32.totalorder %s19, 1
      %s553 = scalar_select %p552, %s19, 1
      %s554 = smul.addr %s553, 2
      %s555 = smul.addr %s554, 8
      %s556 = scalar_lea.vmem %s5, %s555
      %p557 = scmp.lt.s32.totalorder %s19, 1
      %s558 = scalar_select %p557, %s19, 1
      %s559 = smul.addr %s558, 8
      %s560 = scalar_lea.vmem %s6, %s559
      %p561 = scmp.lt.s32.totalorder %s19, 1
      %s562 = scalar_select %p561, %s19, 1
      %s563 = smul.addr %s562, 8
      %s564 = scalar_lea.vmem %s7, %s563
      // Predicated region
      $region41: #{encoder_block_forward.4} parent=39 // pred_check
        %p565 = pneg %p147
      $region42: #{encoder_block_forward.4} parent=39 // pred_check_branch
        %567 = sbr.rel (%p565) target = $region44
      $region43: #{encoder_block_forward.4} parent=39 // pred_region
        _
      $region44: #{encoder_block_forward.4} parent=39 // pred_fallthru
        _
      // Predicated region
      $region45: #{encoder_block_forward.4} parent=39 // pred_check
        %p568 = pneg %p173
      $region46: #{encoder_block_forward.4} parent=39 // pred_check_branch
        %570 = sbr.rel (%p568) target = $region48
      $region47: #{encoder_block_forward.4} parent=39 // pred_region
        _
      $region48: #{encoder_block_forward.4} parent=39 // pred_fallthru
        _
      // Predicated region
      $region49: #{encoder_block_forward.4} parent=39 // pred_check
        %p571 = pneg %p199
      $region50: #{encoder_block_forward.4} parent=39 // pred_check_branch
        %573 = sbr.rel (%p571) target = $region52
      $region51: #{encoder_block_forward.4} parent=39 // pred_region
        _
      $region52: #{encoder_block_forward.4} parent=39 // pred_fallthru
        _
    $region40: #{encoder_block_forward.4} parent=5 // pred_fallthru
      _
    %p574 = scmp.le.s32.totalorder 2, %s14
    // Predicated region
    $region53: #{encoder_block_forward.4} parent=5 // pred_check
      %p575 = pneg %p574
    $region54: #{encoder_block_forward.4} parent=5 // pred_check_branch
      %577 = sbr.rel (%p575) target = $region56
    $region55: #{encoder_block_forward.4} parent=5 // pred_region
      %s578 = ssub.s32 %s14, 2
      // Predicated region
      $region57: #{encoder_block_forward.4} parent=55 // pred_check
        %p579 = pneg %p153
      $region58: #{encoder_block_forward.4} parent=55 // pred_check_branch
        %581 = sbr.rel (%p579) target = $region60
      $region59: #{encoder_block_forward.4} parent=55 // pred_region
        %p582 = scmp.lt.s32.totalorder %s20, 1
        %s583 = scalar_select %p582, %s20, 1
        %s584 = smul.addr %s583, 2
        %s585 = smul.addr %s584, 8
        %s586 = scalar_lea.vmem %s5, %s585
      $region60: #{encoder_block_forward.4} parent=55 // pred_fallthru
        _
      // Predicated region
      $region61: #{encoder_block_forward.4} parent=55 // pred_check
        %p587 = pneg %p179
      $region62: #{encoder_block_forward.4} parent=55 // pred_check_branch
        %589 = sbr.rel (%p587) target = $region64
      $region63: #{encoder_block_forward.4} parent=55 // pred_region
        %p590 = scmp.lt.s32.totalorder %s20, 1
        %s591 = scalar_select %p590, %s20, 1
        %s592 = smul.addr %s591, 8
        %s593 = scalar_lea.vmem %s6, %s592
      $region64: #{encoder_block_forward.4} parent=55 // pred_fallthru
        _
      // Predicated region
      $region65: #{encoder_block_forward.4} parent=55 // pred_check
        %p594 = pneg %p205
      $region66: #{encoder_block_forward.4} parent=55 // pred_check_branch
        %596 = sbr.rel (%p594) target = $region68
      $region67: #{encoder_block_forward.4} parent=55 // pred_region
        %p597 = scmp.lt.s32.totalorder %s20, 1
        %s598 = scalar_select %p597, %s20, 1
        %s599 = smul.addr %s598, 8
        %s600 = scalar_lea.vmem %s7, %s599
      $region68: #{encoder_block_forward.4} parent=55 // pred_fallthru
        _
    $region56: #{encoder_block_forward.4} parent=5 // pred_fallthru
      _
  $region6: #{encoder_block_forward.4} parent=0 // loop_footer
    %s18 = sadd.s32 1, %s14
  $region7: #{encoder_block_forward.4} parent=0 // loop_footer_branch
    %13 = sbr.rel target = $region3
  $region8: #{encoder_block_forward.4} parent=0 // loop_exit
    _

// kernel: encoder_block_forward.3
$region0: #{encoder_block_forward.3}
  #allocation0 [shape = 'u32[]', space=smem, size = 0x4, offset = 0x4, fixed_abs, tag = 'smem constant byte address 0x4 - core index']
  #allocation1 [shape = 'u32[144,128]{1,0:T(1,128)}', space=vmem, size = 0x12000, scoped, tag = 'internal scratch']
  %s0 = inlined_call_operand.vmem [shape: f32[2,8,256], index: 0, kind: input, shape index: {}]
  %s1 = inlined_call_operand.vmem [shape: f32[8,1], index: 1, kind: input, shape index: {}]
  %s2 = inlined_call_operand.vmem [shape: f32[8,1], index: 2, kind: input, shape index: {}]
  %s3 = inlined_call_operand.vmem [shape: bf16[8,72], index: 3, kind: input, shape index: {}]
  %s4 = inlined_call_operand.vmem [shape: f32[8,1], index: 4, kind: input, shape index: {}]
  %s5 = inlined_call_operand.vmem [shape: f32[2,8,256], index: 5, kind: output, shape index: {0}]
  %s6 = inlined_call_operand.vmem [shape: f32[2,8,1], index: 6, kind: output, shape index: {1}]
  %s7 = inlined_call_operand.vmem [shape: f32[2,8,1], index: 7, kind: output, shape index: {2}]
  %8 = xla_tuple %s5, %s6, %s7
  %s9 = sld [smem:[#allocation0]]
  $region69: #{encoder_block_forward.3} parent=0
    _
  %s11 = ssub.s32 1, %s9
  %s12 = scalar_select 0, %s11, %s9
  loop: start=0, step=1, limit=4
  $region2: #{encoder_block_forward.3} parent=0 // loop_pre_header
    _
  $region3: #{encoder_block_forward.3} parent=0 // loop_header
    %s14 = sphi 0, %s18
    %p15 = scmp.ge.s32.totalorder %s14, 4
    %s24 = sphi 0, %s26
    %s27 = sphi 0, %s24
    %s28 = sphi 0, %s27
    %s44 = sphi 0, %s28
    %s48 = sphi 0, %s48
    %s50 = sphi 0, %s48
    %s51 = sphi 0, %s50
    %s65 = sphi 0, %s51
    %s69 = sphi 0, %s69
    %s71 = sphi 0, %s69
    %s72 = sphi 0, %s71
    %s86 = sphi 0, %s72
    %s90 = sphi 0, %s90
    %s92 = sphi 0, %s90
    %s93 = sphi 0, %s92
    %s107 = sphi 0, %s93
    %s111 = sphi 0, %s111
    %s113 = sphi 0, %s111
    %s114 = sphi 0, %s113
    %s128 = sphi 0, %s114
    %s134 = sphi 0, %s136
    %s137 = sphi 0, %s134
    %s138 = sphi 0, %s137
    %s154 = sphi 0, %s138
    %s160 = sphi 0, %s162
    %s163 = sphi 0, %s160
    %s164 = sphi 0, %s163
    %s180 = sphi 0, %s164
    %s186 = sphi 0, %s188
    %s189 = sphi 0, %s186
    %s190 = sphi 0, %s189
    %s206 = sphi 0, %s190
  $region4: #{encoder_block_forward.3} parent=0 // loop_header_branch
    %17 = sbr.rel (%p15) target = $region8
  $region5: #{encoder_block_forward.3} parent=0 // loop_body
    %s19 = ssub.s32 %s14, 1
    %s20 = ssub.s32 %s14, 2
    %s21 = sadd.s32 %s14, 1
    %s22 = ssub.s32 %s14, %s21
    %p23 = scmp.eq.s32.totalorder %s22, 0
    %s25 = sadd.s32 %s24, 1
    %s26 = scalar_select %p23, %s24, %s25
    %p29 = pneg %p23
    %p30 = scmp.eq.s32.totalorder %s14, 1
    %p31 = por %p29, %p30
    %p32 = scmp.ne.s32.totalorder %s24, %s27
    %p33 = scmp.eq.s32.totalorder %s14, 0
    %p34 = por %p32, %p33
    %p35 = scmp.ne.s32.totalorder %s24, %s27
    %p36 = scmp.eq.s32.totalorder %s19, 1
    %p37 = por %p35, %p36
    %p38 = scmp.ne.s32.totalorder %s27, %s28
    %p39 = scmp.eq.s32.totalorder %s19, 0
    %p40 = por %p38, %p39
    %p41 = scmp.ne.s32.totalorder %s27, %s28
    %p42 = scmp.eq.s32.totalorder %s20, 1
    %p43 = por %p41, %p42
    %p45 = scmp.ne.s32.totalorder %s28, %s44
    %p46 = scmp.eq.s32.totalorder %s20, 0
    %p47 = por %p45, %p46
    %s49 = sadd.s32 %s48, 1
    %p52 = scmp.eq.s32.totalorder %s14, 1
    %p53 = scmp.ne.s32.totalorder %s48, %s50
    %p54 = scmp.eq.s32.totalorder %s14, 0
    %p55 = por %p53, %p54
    %p56 = scmp.ne.s32.totalorder %s48, %s50
    %p57 = scmp.eq.s32.totalorder %s19, 1
    %p58 = por %p56, %p57
    %p59 = scmp.ne.s32.totalorder %s50, %s51
    %p60 = scmp.eq.s32.totalorder %s19, 0
    %p61 = por %p59, %p60
    %p62 = scmp.ne.s32.totalorder %s50, %s51
    %p63 = scmp.eq.s32.totalorder %s20, 1
    %p64 = por %p62, %p63
    %p66 = scmp.ne.s32.totalorder %s51, %s65
    %p67 = scmp.eq.s32.totalorder %s20, 0
    %p68 = por %p66, %p67
    %s70 = sadd.s32 %s69, 1
    %p73 = scmp.eq.s32.totalorder %s14, 1
    %p74 = scmp.ne.s32.totalorder %s69, %s71
    %p75 = scmp.eq.s32.totalorder %s14, 0
    %p76 = por %p74, %p75
    %p77 = scmp.ne.s32.totalorder %s69, %s71
    %p78 = scmp.eq.s32.totalorder %s19, 1
    %p79 = por %p77, %p78
    %p80 = scmp.ne.s32.totalorder %s71, %s72
    %p81 = scmp.eq.s32.totalorder %s19, 0
    %p82 = por %p80, %p81
    %p83 = scmp.ne.s32.totalorder %s71, %s72
    %p84 = scmp.eq.s32.totalorder %s20, 1
    %p85 = por %p83, %p84
    %p87 = scmp.ne.s32.totalorder %s72, %s86
    %p88 = scmp.eq.s32.totalorder %s20, 0
    %p89 = por %p87, %p88
    %s91 = sadd.s32 %s90, 1
    %p94 = scmp.eq.s32.totalorder %s14, 1
    %p95 = scmp.ne.s32.totalorder %s90, %s92
    %p96 = scmp.eq.s32.totalorder %s14, 0
    %p97 = por %p95, %p96
    %p98 = scmp.ne.s32.totalorder %s90, %s92
    %p99 = scmp.eq.s32.totalorder %s19, 1
    %p100 = por %p98, %p99
    %p101 = scmp.ne.s32.totalorder %s92, %s93
    %p102 = scmp.eq.s32.totalorder %s19, 0
    %p103 = por %p101, %p102
    %p104 = scmp.ne.s32.totalorder %s92, %s93
    %p105 = scmp.eq.s32.totalorder %s20, 1
    %p106 = por %p104, %p105
    %p108 = scmp.ne.s32.totalorder %s93, %s107
    %p109 = scmp.eq.s32.totalorder %s20, 0
    %p110 = por %p108, %p109
    %s112 = sadd.s32 %s111, 1
    %p115 = scmp.eq.s32.totalorder %s14, 1
    %p116 = scmp.ne.s32.totalorder %s111, %s113
    %p117 = scmp.eq.s32.totalorder %s14, 0
    %p118 = por %p116, %p117
    %p119 = scmp.ne.s32.totalorder %s111, %s113
    %p120 = scmp.eq.s32.totalorder %s19, 1
    %p121 = por %p119, %p120
    %p122 = scmp.ne.s32.totalorder %s113, %s114
    %p123 = scmp.eq.s32.totalorder %s19, 0
    %p124 = por %p122, %p123
    %p125 = scmp.ne.s32.totalorder %s113, %s114
    %p126 = scmp.eq.s32.totalorder %s20, 1
    %p127 = por %p125, %p126
    %p129 = scmp.ne.s32.totalorder %s114, %s128
    %p130 = scmp.eq.s32.totalorder %s20, 0
    %p131 = por %p129, %p130
    %s132 = ssub.s32 %s14, %s21
    %p133 = scmp.eq.s32.totalorder %s132, 0
    %s135 = sadd.s32 %s134, 1
    %s136 = scalar_select %p133, %s134, %s135
    %p139 = pneg %p133
    %p140 = scmp.eq.s32.totalorder %s14, 1
    %p141 = por %p139, %p140
    %p142 = scmp.ne.s32.totalorder %s134, %s137
    %p143 = scmp.eq.s32.totalorder %s14, 0
    %p144 = por %p142, %p143
    %p145 = scmp.ne.s32.totalorder %s134, %s137
    %p146 = scmp.eq.s32.totalorder %s19, 1
    %p147 = por %p145, %p146
    %p148 = scmp.ne.s32.totalorder %s137, %s138
    %p149 = scmp.eq.s32.totalorder %s19, 0
    %p150 = por %p148, %p149
    %p151 = scmp.ne.s32.totalorder %s137, %s138
    %p152 = scmp.eq.s32.totalorder %s20, 1
    %p153 = por %p151, %p152
    %p155 = scmp.ne.s32.totalorder %s138, %s154
    %p156 = scmp.eq.s32.totalorder %s20, 0
    %p157 = por %p155, %p156
    %s158 = ssub.s32 %s14, %s21
    %p159 = scmp.eq.s32.totalorder %s158, 0
    %s161 = sadd.s32 %s160, 1
    %s162 = scalar_select %p159, %s160, %s161
    %p165 = pneg %p159
    %p166 = scmp.eq.s32.totalorder %s14, 1
    %p167 = por %p165, %p166
    %p168 = scmp.ne.s32.totalorder %s160, %s163
    %p169 = scmp.eq.s32.totalorder %s14, 0
    %p170 = por %p168, %p169
    %p171 = scmp.ne.s32.totalorder %s160, %s163
    %p172 = scmp.eq.s32.totalorder %s19, 1
    %p173 = por %p171, %p172
    %p174 = scmp.ne.s32.totalorder %s163, %s164
    %p175 = scmp.eq.s32.totalorder %s19, 0
    %p176 = por %p174, %p175
    %p177 = scmp.ne.s32.totalorder %s163, %s164
    %p178 = scmp.eq.s32.totalorder %s20, 1
    %p179 = por %p177, %p178
    %p181 = scmp.ne.s32.totalorder %s164, %s180
    %p182 = scmp.eq.s32.totalorder %s20, 0
    %p183 = por %p181, %p182
    %s184 = ssub.s32 %s14, %s21
    %p185 = scmp.eq.s32.totalorder %s184, 0
    %s187 = sadd.s32 %s186, 1
    %s188 = scalar_select %p185, %s186, %s187
    %p191 = pneg %p185
    %p192 = scmp.eq.s32.totalorder %s14, 1
    %p193 = por %p191, %p192
    %p194 = scmp.ne.s32.totalorder %s186, %s189
    %p195 = scmp.eq.s32.totalorder %s14, 0
    %p196 = por %p194, %p195
    %p197 = scmp.ne.s32.totalorder %s186, %s189
    %p198 = scmp.eq.s32.totalorder %s19, 1
    %p199 = por %p197, %p198
    %p200 = scmp.ne.s32.totalorder %s189, %s190
    %p201 = scmp.eq.s32.totalorder %s19, 0
    %p202 = por %p200, %p201
    %p203 = scmp.ne.s32.totalorder %s189, %s190
    %p204 = scmp.eq.s32.totalorder %s20, 1
    %p205 = por %p203, %p204
    %p207 = scmp.ne.s32.totalorder %s190, %s206
    %p208 = scmp.eq.s32.totalorder %s20, 0
    %p209 = por %p207, %p208
    %p210 = scmp.le.s32.totalorder 1, %s14
    %p211 = scmp.lt.s32.totalorder %s14, 3
    %p212 = pnand %p210, %p211
    %p213 = pneg %p212
    // Predicated region
    $region9: #{encoder_block_forward.3} parent=5 // pred_check
      _
    $region10: #{encoder_block_forward.3} parent=5 // pred_check_branch
      %215 = sbr.rel (%p212) target = $region12
    $region11: #{encoder_block_forward.3} parent=5 // pred_region
      %s216 = ssub.s32 %s14, 1
      // Predicated region
      $region13: #{encoder_block_forward.3} parent=11 // pred_check
        %p217 = pneg %p61
      $region14: #{encoder_block_forward.3} parent=11 // pred_check_branch
        %219 = sbr.rel (%p217) target = $region16
      $region15: #{encoder_block_forward.3} parent=11 // pred_region
        _
      $region16: #{encoder_block_forward.3} parent=11 // pred_fallthru
        _
      // Predicated region
      $region17: #{encoder_block_forward.3} parent=11 // pred_check
        %p220 = pneg %p82
      $region18: #{encoder_block_forward.3} parent=11 // pred_check_branch
        %222 = sbr.rel (%p220) target = $region20
      $region19: #{encoder_block_forward.3} parent=11 // pred_region
        _
      $region20: #{encoder_block_forward.3} parent=11 // pred_fallthru
        _
      // Predicated region
      $region21: #{encoder_block_forward.3} parent=11 // pred_check
        %p223 = pneg %p103
      $region22: #{encoder_block_forward.3} parent=11 // pred_check_branch
        %225 = sbr.rel (%p223) target = $region24
      $region23: #{encoder_block_forward.3} parent=11 // pred_region
        _
      $region24: #{encoder_block_forward.3} parent=11 // pred_fallthru
        _
      // Predicated region
      $region25: #{encoder_block_forward.3} parent=11 // pred_check
        %p226 = pneg %p124
      $region26: #{encoder_block_forward.3} parent=11 // pred_check_branch
        %228 = sbr.rel (%p226) target = $region28
      $region27: #{encoder_block_forward.3} parent=11 // pred_region
        _
      $region28: #{encoder_block_forward.3} parent=11 // pred_fallthru
        _
    $region12: #{encoder_block_forward.3} parent=5 // pred_fallthru
      _
    %p229 = scmp.lt.s32.totalorder %s14, 2
    // Predicated region
    $region29: #{encoder_block_forward.3} parent=5 // pred_check
      %p230 = pneg %p229
    $region30: #{encoder_block_forward.3} parent=5 // pred_check_branch
      %232 = sbr.rel (%p230) target = $region32
    $region31: #{encoder_block_forward.3} parent=5 // pred_region
      // Predicated region
      $region33: #{encoder_block_forward.3} parent=31 // pred_check
        %p233 = pneg %p34
      $region34: #{encoder_block_forward.3} parent=31 // pred_check_branch
        %235 = sbr.rel (%p233) target = $region36
      $region35: #{encoder_block_forward.3} parent=31 // pred_region
        %p236 = scmp.lt.s32.totalorder %s14, 1
        %s237 = scalar_select %p236, %s14, 1
        %s238 = smul.addr %s237, 2
        %s239 = smul.addr %s238, 8
        %s240 = scalar_lea.vmem %s0, %s239
      $region36: #{encoder_block_forward.3} parent=31 // pred_fallthru
        _
    $region32: #{encoder_block_forward.3} parent=5 // pred_fallthru
      _
    %p241 = scmp.le.s32.totalorder 1, %s14
    %p242 = scmp.lt.s32.totalorder %s14, 3
    %p243 = pnand %p241, %p242
    %p244 = pneg %p243
    // Predicated region
    $region37: #{encoder_block_forward.3} parent=5 // pred_check
      _
    $region38: #{encoder_block_forward.3} parent=5 // pred_check_branch
      %246 = sbr.rel (%p243) target = $region40
    $region39: #{encoder_block_forward.3} parent=5 // pred_region
      %s247 = ssub.s32 %s14, 1
      %p248 = scmp.lt.s32.totalorder %s19, 1
      %s249 = scalar_select %p248, %s19, 1
      %s250 = smul.addr %s249, 2
      %s251 = smul.addr %s250, 8
      %s252 = scalar_lea.vmem %s0, %s251
      %p253 = pneg %p40
      %p254 = pneg %p37
      %p255 = pneg %p61
      %p256 = pneg %p58
      %p257 = pneg %p82
      %p258 = pneg %p79
      %p259 = pneg %p103
      %p260 = pneg %p100
      %p261 = pneg %p124
      %p262 = pneg %p121
      %p263 = pneg %p150
      %p264 = pneg %p147
      %p265 = scmp.lt.s32.totalorder %s19, 1
      %s266 = scalar_select %p265, %s19, 1
      %s267 = smul.addr %s266, 2
      %s268 = smul.addr %s267, 8
      %s269 = scalar_lea.vmem %s5, %s268
      %p270 = pneg %p176
      %p271 = pneg %p173
      %p272 = scmp.lt.s32.totalorder %s19, 1
      %s273 = scalar_select %p272, %s19, 1
      %s274 = smul.addr %s273, 8
      %s275 = scalar_lea.vmem %s6, %s274
      %p276 = pneg %p202
      %p277 = pneg %p199
      %p278 = scmp.lt.s32.totalorder %s19, 1
      %s279 = scalar_select %p278, %s19, 1
      %s280 = smul.addr %s279, 8
      %s281 = scalar_lea.vmem %s7, %s280
      %p282 = scmp.lt.s32.totalorder %s19, 1
      %s283 = scalar_select %p282, %s19, 1
      %s284 = smul.addr %s283, 2
      %s285 = smul.addr %s284, 8
      %s286 = scalar_lea.vmem %s0, %s285
      %p287 = scmp.lt.s32.totalorder %s19, 1
      %s288 = scalar_select %p287, %s19, 1
      %s289 = smul.addr %s288, 2
      %s290 = smul.addr %s289, 8
      %s291 = scalar_lea.vmem %s5, %s290
      %p292 = scmp.lt.s32.totalorder %s19, 1
      %s293 = scalar_select %p292, %s19, 1
      %s294 = smul.addr %s293, 8
      %s295 = scalar_lea.vmem %s6, %s294
      %p296 = scmp.lt.s32.totalorder %s19, 1
      %s297 = scalar_select %p296, %s19, 1
      %s298 = smul.addr %s297, 8
      %s299 = scalar_lea.vmem %s7, %s298
      %v301 = vld [vmem:[%s286] sm:$0xff]
      %v302 = vld [vmem:[%s286 + $0x8] sm:$0xff]
      %305 = vrot.lane.b32.xlu0 %v301, 17
      %v306 = vpop.permute.xlu0 %305
      %307 = vrot.lane.b32.xlu0 %v302, 17
      %v308 = vpop.permute.xlu0 %307
      %vm309 = vcmask 138240
      %v310 = vsel %vm309, %v306, %v308
      %v314 = vsel %vm309, 0.0, %v306
      %v315 = vsel %vm309, %v308, 0.0
      %v316 = vlaneseq
      %v317 = vand.u32 %v316, 127
      %v318 = vadd.s32 %v317, 128
      %vm319 = vcmp.lt.s32.totalorder %v317, 0
      %v320 = vsub.s32 0, %v317
      %v321 = vsel %vm319, %v320, %v317
      %v322 = vshrl.u32 %v321, 4
      %v323 = vand.u32 %v321, 15
      %v324 = vsub.s32 0, %v323
      %v325 = vsel %vm319, %v324, %v323
      %vm326 = vcmp.lt.s32.totalorder %v318, 0
      %v327 = vsub.s32 0, %v318
      %v328 = vsel %vm326, %v327, %v318
      %v329 = vshrl.u32 %v328, 4
      %v330 = vand.u32 %v328, 15
      %v331 = vsub.s32 0, %v330
      %v332 = vsel %vm326, %v331, %v330
      %vm333 = vcmp.ne.s32.totalorder %v325, 0
      %vm334 = vcmp.ne.s32.totalorder %v332, 0
      %vm335 = vcmp.lt.s32.totalorder %v325, 0
      %vm336 = vcmp.lt.s32.totalorder %v332, 0
      %vm337 = vmand %vm335, %vm333
      %vm338 = vmand %vm336, %vm334
      %v339 = vadd.s32 %v325, 16
      %v340 = vadd.s32 %v332, 16
      %v341 = vsel %vm337, %v339, %v325
      %v342 = vsel %vm338, %v340, %v332
      %vm343 = vcmp.ge.s32.totalorder %v341, 1
      %vm344 = vcmp.ge.s32.totalorder %v342, 1
      %vm345 = vcmp.le.s32.totalorder %v341, 14
      %vm346 = vcmp.le.s32.totalorder %v342, 14
      %v347 = vsel %vm343, %v314, 0.0
      %v348 = vsel %vm344, %v310, 0.0
      %351 = vrot.lane.b32.xlu0 %v314, 126
      %v352 = vpop.permute.xlu0 %351
      %353 = vrot.lane.b32.xlu0 %v310, 126
      %v354 = vpop.permute.xlu0 %353
      %355 = vrot.lane.b32.xlu0 %v315, 126
      %v356 = vpop.permute.xlu0 %355
      %vm357 = vcmask 1031168
      %v358 = vsel %vm357, %v352, %v354
      %v359 = vsel %vm357, %v354, %v356
      %v362 = vsel %vm345, %v358, 0.0
      %v363 = vsel %vm346, %v359, 0.0
      %364 = vrot.lane.b32.xlu0 %v314, 112
      %v365 = vpop.permute.xlu0 %364
      %366 = vrot.lane.b32.xlu0 %v310, 112
      %v367 = vpop.permute.xlu0 %366
      %368 = vrot.lane.b32.xlu0 %v315, 112
      %v369 = vpop.permute.xlu0 %368
      %vm370 = vcmask 916480
      %v371 = vsel %vm370, %v365, %v367
      %v372 = vsel %vm370, %v367, %v369
      %v375 = vsel %vm343, %v371, 0.0
      %v376 = vsel %vm344, %v372, 0.0
      %377 = vrot.lane.b32.xlu0 %v314, 110
      %v378 = vpop.permute.xlu0 %377
      %379 = vrot.lane.b32.xlu0 %v310, 110
      %v380 = vpop.permute.xlu0 %379
      %381 = vrot.lane.b32.xlu0 %v315, 110
      %v382 = vpop.permute.xlu0 %381
      %vm383 = vcmask 900096
      %v384 = vsel %vm383, %v378, %v380
      %v385 = vsel %vm383, %v380, %v382
      %v388 = vsel %vm345, %v384, 0.0
      %v389 = vsel %vm346, %v385, 0.0
      %390 = vrot.lane.b32.xlu0 %v314, 96
      %v391 = vpop.permute.xlu0 %390
      %392 = vrot.lane.b32.xlu0 %v310, 96
      %v393 = vpop.permute.xlu0 %392
      %394 = vrot.lane.b32.xlu0 %v315, 96
      %v395 = vpop.permute.xlu0 %394
      %vm396 = vcmask 785408
      %v397 = vsel %vm396, %v391, %v393
      %v398 = vsel %vm396, %v393, %v395
      %v401 = vsel %vm343, %v397, 0.0
      %v402 = vsel %vm344, %v398, 0.0
      %403 = vrot.lane.b32.xlu0 %v314, 94
      %v404 = vpop.permute.xlu0 %403
      %405 = vrot.lane.b32.xlu0 %v310, 94
      %v406 = vpop.permute.xlu0 %405
      %407 = vrot.lane.b32.xlu0 %v315, 94
      %v408 = vpop.permute.xlu0 %407
      %vm409 = vcmask 769024
      %v410 = vsel %vm409, %v404, %v406
      %v411 = vsel %vm409, %v406, %v408
      %v414 = vsel %vm345, %v410, 0.0
      %v415 = vsel %vm346, %v411, 0.0
      %416 = vrot.lane.b32.xlu0 %v314, 127
      %v417 = vpop.permute.xlu0 %416
      %418 = vrot.lane.b32.xlu0 %v310, 127
      %v419 = vpop.permute.xlu0 %418
      %420 = vrot.lane.b32.xlu0 %v315, 127
      %v421 = vpop.permute.xlu0 %420
      %vm422 = vcmask 1039360
      %v423 = vsel %vm422, %v417, %v419
      %v424 = vsel %vm422, %v419, %v421
      %427 = vrot.lane.b32.xlu0 %v314, 111
      %v428 = vpop.permute.xlu0 %427
      %429 = vrot.lane.b32.xlu0 %v310, 111
      %v430 = vpop.permute.xlu0 %429
      %431 = vrot.lane.b32.xlu0 %v315, 111
      %v432 = vpop.permute.xlu0 %431
      %vm433 = vcmask 908288
      %v434 = vsel %vm433, %v428, %v430
      %v435 = vsel %vm433, %v430, %v432
      %438 = vrot.lane.b32.xlu0 %v314, 95
      %v439 = vpop.permute.xlu0 %438
      %440 = vrot.lane.b32.xlu0 %v310, 95
      %v441 = vpop.permute.xlu0 %440
      %442 = vrot.lane.b32.xlu0 %v315, 95
      %v443 = vpop.permute.xlu0 %442
      %vm444 = vcmask 777216
      %v445 = vsel %vm444, %v439, %v441
      %v446 = vsel %vm444, %v441, %v443
      %v449 = vpack.c.bf16 %v423, %v347
      %v450 = vpack.c.bf16 %v424, %v348
      %v451 = vpack.c.bf16 %v375, %v362
      %v452 = vpack.c.bf16 %v376, %v363
      %v453 = vpack.c.bf16 %v388, %v434
      %v454 = vpack.c.bf16 %v389, %v435
      %v455 = vpack.c.bf16 %v445, %v401
      %v456 = vpack.c.bf16 %v446, %v402
      %v457 = vpack.c.bf16 %v414, %v414
      %v458 = vpack.c.bf16 %v415, %v415
      %v459 = vld [vmem:[%s3] sm:$0xf]
      %v460 = vld [vmem:[%s4] sm:$0xff]
      %462 = vset.pattern.permute.xlu0 0
      %463 = vperm.xlu0 %462, %v460
      %v464 = vpop.permute.xlu0 %463
      %vm466 = vcmask 588800
      %v468 = vsel %vm466, %v459, 0
      %vm470 = vcmask 1043456
      %v472 = vsel %vm470, %v457, 0
      %v475 = vsel %vm470, %v458, 0
      %477 = vmatprep.subr.bf16.mxu0 0
      %478 = vmatpush1.bf16.msra.mxu0 0
      %479 = vmatprep.subr.bf16.mxu0 0
      %480 = vmatpush1.bf16.msra.mxu0 0
      %481 = vmatprep.subr.bf16.mxu0 0
      %482 = vmatpush1.bf16.msra.mxu0 0
      %483 = vmatprep.subr.bf16.mxu0 %v475
      %484 = vmatpush1.bf16.msra.mxu0 %v472
      %485 = vmatprep.subr.bf16.mxu0 %v456
      %486 = vmatpush1.bf16.msra.mxu0 %v455
      %487 = vmatprep.subr.bf16.mxu0 %v454
      %488 = vmatpush1.bf16.msra.mxu0 %v453
      %489 = vmatprep.subr.bf16.mxu0 %v452
      %490 = vmatpush1.bf16.msra.mxu0 %v451
      %491 = vmatprep.subr.bf16.mxu0 %v450
      %492 = vmatpush1.bf16.msra.mxu0 %v449
      %493 = vmatprep.subr.bf16.mxu0 0
      %494 = vmatpush2.bf16.msra.mxu0 0
      %495 = vmatprep.subr.bf16.mxu0 0
      %496 = vmatpush2.bf16.msra.mxu0 0
      %497 = vmatprep.subr.bf16.mxu0 0
      %498 = vmatpush2.bf16.msra.mxu0 0
      %499 = vmatprep.subr.bf16.mxu0 0
      %500 = vmatpush2.bf16.msra.mxu0 0
      %501 = vmatprep.subr.bf16.mxu0 0
      %502 = vmatpush2.bf16.msra.mxu0 0
      %503 = vmatprep.subr.bf16.mxu0 0
      %504 = vmatpush2.bf16.msra.mxu0 0
      %505 = vmatprep.subr.bf16.mxu0 0
      %506 = vmatpush2.bf16.msra.mxu0 0
      %507 = vmatprep.subr.bf16.mxu0 0
      %508 = vmatpush2.bf16.msra.mxu0 0
      %509 = vmatprep.mubr.bf16.mxu0 0
      %510 = vmatmul.mubr.bf16.gmra.mxu0 %v468
      %v511 = vpop.f32.mrf.mxu0
      %v512 = vadd.f32 %v464, %v511
      %v513 = vpop.f32.mrf.mxu0
      %v514 = vadd.f32 %v464, %v513
      %v515 = vpop.f32.mrf.mxu0
      %v516 = vpop.f32.mrf.mxu0
      %517 = vdwg.mxu0
      %518 = vst [vmem:[%s291] sm:$0xff] %v512
      %519 = vst [vmem:[%s291 + $0x8] sm:$0xff] %v514
      %v520 = vadd.f32 %v512, %v514
      %521 = vadd.xlane.f32.xlu0 %v520
      %v522 = vpop.xlane.xlu0 %521
      %v523 = vmul.f32 %v522, 0.00390625
      %v524 = vsub.f32 %v512, %v523
      %v525 = vsub.f32 %v514, %v523
      %vm526 = vcmask 7168
      %527 = vst.msk [vmem:[%s295] sm:$0xff] %vm526, %v522
      %v528 = vmul.f32 %v524, %v524
      %v529 = vmul.f32 %v525, %v525
      %v530 = vadd.f32 %v528, %v529
      %531 = vadd.xlane.f32.xlu0 %v530
      %v532 = vpop.xlane.xlu0 %531
      %533 = vst.msk [vmem:[%s299] sm:$0xff] %vm526, %v532
      %p534 = scmp.lt.s32.totalorder %s19, 1
      %s535 = scalar_select %p534, %s19, 1
      %s536 = smul.addr %s535, 2
      %s537 = smul.addr %s536, 8
      %s538 = scalar_lea.vmem %s5, %s537
      %p539 = scmp.lt.s32.totalorder %s19, 1
      %s540 = scalar_select %p539, %s19, 1
      %s541 = smul.addr %s540, 8
      %s542 = scalar_lea.vmem %s6, %s541
      %p543 = scmp.lt.s32.totalorder %s19, 1
      %s544 = scalar_select %p543, %s19, 1
      %s545 = smul.addr %s544, 8
      %s546 = scalar_lea.vmem %s7, %s545
      // Predicated region
      $region41: #{encoder_block_forward.3} parent=39 // pred_check
        %p547 = pneg %p147
      $region42: #{encoder_block_forward.3} parent=39 // pred_check_branch
        %549 = sbr.rel (%p547) target = $region44
      $region43: #{encoder_block_forward.3} parent=39 // pred_region
        _
      $region44: #{encoder_block_forward.3} parent=39 // pred_fallthru
        _
      // Predicated region
      $region45: #{encoder_block_forward.3} parent=39 // pred_check
        %p550 = pneg %p173
      $region46: #{encoder_block_forward.3} parent=39 // pred_check_branch
        %552 = sbr.rel (%p550) target = $region48
      $region47: #{encoder_block_forward.3} parent=39 // pred_region
        _
      $region48: #{encoder_block_forward.3} parent=39 // pred_fallthru
        _
      // Predicated region
      $region49: #{encoder_block_forward.3} parent=39 // pred_check
        %p553 = pneg %p199
      $region50: #{encoder_block_forward.3} parent=39 // pred_check_branch
        %555 = sbr.rel (%p553) target = $region52
      $region51: #{encoder_block_forward.3} parent=39 // pred_region
        _
      $region52: #{encoder_block_forward.3} parent=39 // pred_fallthru
        _
    $region40: #{encoder_block_forward.3} parent=5 // pred_fallthru
      _
    %p556 = scmp.le.s32.totalorder 2, %s14
    // Predicated region
    $region53: #{encoder_block_forward.3} parent=5 // pred_check
      %p557 = pneg %p556
    $region54: #{encoder_block_forward.3} parent=5 // pred_check_branch
      %559 = sbr.rel (%p557) target = $region56
    $region55: #{encoder_block_forward.3} parent=5 // pred_region
      %s560 = ssub.s32 %s14, 2
      // Predicated region
      $region57: #{encoder_block_forward.3} parent=55 // pred_check
        %p561 = pneg %p153
      $region58: #{encoder_block_forward.3} parent=55 // pred_check_branch
        %563 = sbr.rel (%p561) target = $region60
      $region59: #{encoder_block_forward.3} parent=55 // pred_region
        %p564 = scmp.lt.s32.totalorder %s20, 1
        %s565 = scalar_select %p564, %s20, 1
        %s566 = smul.addr %s565, 2
        %s567 = smul.addr %s566, 8
        %s568 = scalar_lea.vmem %s5, %s567
      $region60: #{encoder_block_forward.3} parent=55 // pred_fallthru
        _
      // Predicated region
      $region61: #{encoder_block_forward.3} parent=55 // pred_check
        %p569 = pneg %p179
      $region62: #{encoder_block_forward.3} parent=55 // pred_check_branch
        %571 = sbr.rel (%p569) target = $region64
      $region63: #{encoder_block_forward.3} parent=55 // pred_region
        %p572 = scmp.lt.s32.totalorder %s20, 1
        %s573 = scalar_select %p572, %s20, 1
        %s574 = smul.addr %s573, 8
        %s575 = scalar_lea.vmem %s6, %s574
      $region64: #{encoder_block_forward.3} parent=55 // pred_fallthru
        _
      // Predicated region
      $region65: #{encoder_block_forward.3} parent=55 // pred_check
        %p576 = pneg %p205
      $region66: #{encoder_block_forward.3} parent=55 // pred_check_branch
        %578 = sbr.rel (%p576) target = $region68
      $region67: #{encoder_block_forward.3} parent=55 // pred_region
        %p579 = scmp.lt.s32.totalorder %s20, 1
        %s580 = scalar_select %p579, %s20, 1
        %s581 = smul.addr %s580, 8
        %s582 = scalar_lea.vmem %s7, %s581
      $region68: #{encoder_block_forward.3} parent=55 // pred_fallthru
        _
    $region56: #{encoder_block_forward.3} parent=5 // pred_fallthru
      _
  $region6: #{encoder_block_forward.3} parent=0 // loop_footer
    %s18 = sadd.s32 1, %s14
  $region7: #{encoder_block_forward.3} parent=0 // loop_footer_branch
    %13 = sbr.rel target = $region3
  $region8: #{encoder_block_forward.3} parent=0 // loop_exit
    _

// kernel: encoder_block_forward.5
$region0: #{encoder_block_forward.5}
  #allocation0 [shape = 'u32[]', space=smem, size = 0x4, offset = 0x4, fixed_abs, tag = 'smem constant byte address 0x4 - core index']
  #allocation1 [shape = 'u32[144,128]{1,0:T(1,128)}', space=vmem, size = 0x12000, scoped, tag = 'internal scratch']
  %s0 = inlined_call_operand.vmem [shape: f32[2,8,256], index: 0, kind: input, shape index: {}]
  %s1 = inlined_call_operand.vmem [shape: f32[8,1], index: 1, kind: input, shape index: {}]
  %s2 = inlined_call_operand.vmem [shape: f32[8,1], index: 2, kind: input, shape index: {}]
  %s3 = inlined_call_operand.vmem [shape: f32[256,64], index: 3, kind: input, shape index: {}]
  %s4 = inlined_call_operand.vmem [shape: f32[2,8,256], index: 4, kind: output, shape index: {0}]
  %s5 = inlined_call_operand.vmem [shape: f32[2,8,64], index: 5, kind: output, shape index: {1}]
  %6 = xla_tuple %s4, %s5
  %s7 = sld [smem:[#allocation0]]
  $region57: #{encoder_block_forward.5} parent=0
    _
  %s9 = ssub.s32 1, %s7
  %s10 = scalar_select 0, %s9, %s7
  loop: start=0, step=1, limit=4
  $region2: #{encoder_block_forward.5} parent=0 // loop_pre_header
    _
  $region3: #{encoder_block_forward.5} parent=0 // loop_header
    %s12 = sphi 0, %s16
    %p13 = scmp.ge.s32.totalorder %s12, 4
    %s22 = sphi 0, %s24
    %s25 = sphi 0, %s22
    %s26 = sphi 0, %s25
    %s42 = sphi 0, %s26
    %s46 = sphi 0, %s46
    %s48 = sphi 0, %s46
    %s49 = sphi 0, %s48
    %s63 = sphi 0, %s49
    %s67 = sphi 0, %s67
    %s69 = sphi 0, %s67
    %s70 = sphi 0, %s69
    %s84 = sphi 0, %s70
    %s88 = sphi 0, %s88
    %s90 = sphi 0, %s88
    %s91 = sphi 0, %s90
    %s105 = sphi 0, %s91
    %s111 = sphi 0, %s113
    %s114 = sphi 0, %s111
    %s115 = sphi 0, %s114
    %s131 = sphi 0, %s115
    %s137 = sphi 0, %s139
    %s140 = sphi 0, %s137
    %s141 = sphi 0, %s140
    %s157 = sphi 0, %s141
  $region4: #{encoder_block_forward.5} parent=0 // loop_header_branch
    %15 = sbr.rel (%p13) target = $region8
  $region5: #{encoder_block_forward.5} parent=0 // loop_body
    %s17 = ssub.s32 %s12, 1
    %s18 = ssub.s32 %s12, 2
    %s19 = sadd.s32 %s12, 1
    %s20 = ssub.s32 %s12, %s19
    %p21 = scmp.eq.s32.totalorder %s20, 0
    %s23 = sadd.s32 %s22, 1
    %s24 = scalar_select %p21, %s22, %s23
    %p27 = pneg %p21
    %p28 = scmp.eq.s32.totalorder %s12, 1
    %p29 = por %p27, %p28
    %p30 = scmp.ne.s32.totalorder %s22, %s25
    %p31 = scmp.eq.s32.totalorder %s12, 0
    %p32 = por %p30, %p31
    %p33 = scmp.ne.s32.totalorder %s22, %s25
    %p34 = scmp.eq.s32.totalorder %s17, 1
    %p35 = por %p33, %p34
    %p36 = scmp.ne.s32.totalorder %s25, %s26
    %p37 = scmp.eq.s32.totalorder %s17, 0
    %p38 = por %p36, %p37
    %p39 = scmp.ne.s32.totalorder %s25, %s26
    %p40 = scmp.eq.s32.totalorder %s18, 1
    %p41 = por %p39, %p40
    %p43 = scmp.ne.s32.totalorder %s26, %s42
    %p44 = scmp.eq.s32.totalorder %s18, 0
    %p45 = por %p43, %p44
    %s47 = sadd.s32 %s46, 1
    %p50 = scmp.eq.s32.totalorder %s12, 1
    %p51 = scmp.ne.s32.totalorder %s46, %s48
    %p52 = scmp.eq.s32.totalorder %s12, 0
    %p53 = por %p51, %p52
    %p54 = scmp.ne.s32.totalorder %s46, %s48
    %p55 = scmp.eq.s32.totalorder %s17, 1
    %p56 = por %p54, %p55
    %p57 = scmp.ne.s32.totalorder %s48, %s49
    %p58 = scmp.eq.s32.totalorder %s17, 0
    %p59 = por %p57, %p58
    %p60 = scmp.ne.s32.totalorder %s48, %s49
    %p61 = scmp.eq.s32.totalorder %s18, 1
    %p62 = por %p60, %p61
    %p64 = scmp.ne.s32.totalorder %s49, %s63
    %p65 = scmp.eq.s32.totalorder %s18, 0
    %p66 = por %p64, %p65
    %s68 = sadd.s32 %s67, 1
    %p71 = scmp.eq.s32.totalorder %s12, 1
    %p72 = scmp.ne.s32.totalorder %s67, %s69
    %p73 = scmp.eq.s32.totalorder %s12, 0
    %p74 = por %p72, %p73
    %p75 = scmp.ne.s32.totalorder %s67, %s69
    %p76 = scmp.eq.s32.totalorder %s17, 1
    %p77 = por %p75, %p76
    %p78 = scmp.ne.s32.totalorder %s69, %s70
    %p79 = scmp.eq.s32.totalorder %s17, 0
    %p80 = por %p78, %p79
    %p81 = scmp.ne.s32.totalorder %s69, %s70
    %p82 = scmp.eq.s32.totalorder %s18, 1
    %p83 = por %p81, %p82
    %p85 = scmp.ne.s32.totalorder %s70, %s84
    %p86 = scmp.eq.s32.totalorder %s18, 0
    %p87 = por %p85, %p86
    %s89 = sadd.s32 %s88, 1
    %p92 = scmp.eq.s32.totalorder %s12, 1
    %p93 = scmp.ne.s32.totalorder %s88, %s90
    %p94 = scmp.eq.s32.totalorder %s12, 0
    %p95 = por %p93, %p94
    %p96 = scmp.ne.s32.totalorder %s88, %s90
    %p97 = scmp.eq.s32.totalorder %s17, 1
    %p98 = por %p96, %p97
    %p99 = scmp.ne.s32.totalorder %s90, %s91
    %p100 = scmp.eq.s32.totalorder %s17, 0
    %p101 = por %p99, %p100
    %p102 = scmp.ne.s32.totalorder %s90, %s91
    %p103 = scmp.eq.s32.totalorder %s18, 1
    %p104 = por %p102, %p103
    %p106 = scmp.ne.s32.totalorder %s91, %s105
    %p107 = scmp.eq.s32.totalorder %s18, 0
    %p108 = por %p106, %p107
    %s109 = ssub.s32 %s12, %s19
    %p110 = scmp.eq.s32.totalorder %s109, 0
    %s112 = sadd.s32 %s111, 1
    %s113 = scalar_select %p110, %s111, %s112
    %p116 = pneg %p110
    %p117 = scmp.eq.s32.totalorder %s12, 1
    %p118 = por %p116, %p117
    %p119 = scmp.ne.s32.totalorder %s111, %s114
    %p120 = scmp.eq.s32.totalorder %s12, 0
    %p121 = por %p119, %p120
    %p122 = scmp.ne.s32.totalorder %s111, %s114
    %p123 = scmp.eq.s32.totalorder %s17, 1
    %p124 = por %p122, %p123
    %p125 = scmp.ne.s32.totalorder %s114, %s115
    %p126 = scmp.eq.s32.totalorder %s17, 0
    %p127 = por %p125, %p126
    %p128 = scmp.ne.s32.totalorder %s114, %s115
    %p129 = scmp.eq.s32.totalorder %s18, 1
    %p130 = por %p128, %p129
    %p132 = scmp.ne.s32.totalorder %s115, %s131
    %p133 = scmp.eq.s32.totalorder %s18, 0
    %p134 = por %p132, %p133
    %s135 = ssub.s32 %s12, %s19
    %p136 = scmp.eq.s32.totalorder %s135, 0
    %s138 = sadd.s32 %s137, 1
    %s139 = scalar_select %p136, %s137, %s138
    %p142 = pneg %p136
    %p143 = scmp.eq.s32.totalorder %s12, 1
    %p144 = por %p142, %p143
    %p145 = scmp.ne.s32.totalorder %s137, %s140
    %p146 = scmp.eq.s32.totalorder %s12, 0
    %p147 = por %p145, %p146
    %p148 = scmp.ne.s32.totalorder %s137, %s140
    %p149 = scmp.eq.s32.totalorder %s17, 1
    %p150 = por %p148, %p149
    %p151 = scmp.ne.s32.totalorder %s140, %s141
    %p152 = scmp.eq.s32.totalorder %s17, 0
    %p153 = por %p151, %p152
    %p154 = scmp.ne.s32.totalorder %s140, %s141
    %p155 = scmp.eq.s32.totalorder %s18, 1
    %p156 = por %p154, %p155
    %p158 = scmp.ne.s32.totalorder %s141, %s157
    %p159 = scmp.eq.s32.totalorder %s18, 0
    %p160 = por %p158, %p159
    %p161 = scmp.le.s32.totalorder 1, %s12
    %p162 = scmp.lt.s32.totalorder %s12, 3
    %p163 = pnand %p161, %p162
    %p164 = pneg %p163
    // Predicated region
    $region9: #{encoder_block_forward.5} parent=5 // pred_check
      _
    $region10: #{encoder_block_forward.5} parent=5 // pred_check_branch
      %166 = sbr.rel (%p163) target = $region12
    $region11: #{encoder_block_forward.5} parent=5 // pred_region
      %s167 = ssub.s32 %s12, 1
      // Predicated region
      $region13: #{encoder_block_forward.5} parent=11 // pred_check
        %p168 = pneg %p59
      $region14: #{encoder_block_forward.5} parent=11 // pred_check_branch
        %170 = sbr.rel (%p168) target = $region16
      $region15: #{encoder_block_forward.5} parent=11 // pred_region
        _
      $region16: #{encoder_block_forward.5} parent=11 // pred_fallthru
        _
      // Predicated region
      $region17: #{encoder_block_forward.5} parent=11 // pred_check
        %p171 = pneg %p80
      $region18: #{encoder_block_forward.5} parent=11 // pred_check_branch
        %173 = sbr.rel (%p171) target = $region20
      $region19: #{encoder_block_forward.5} parent=11 // pred_region
        _
      $region20: #{encoder_block_forward.5} parent=11 // pred_fallthru
        _
      // Predicated region
      $region21: #{encoder_block_forward.5} parent=11 // pred_check
        %p174 = pneg %p101
      $region22: #{encoder_block_forward.5} parent=11 // pred_check_branch
        %176 = sbr.rel (%p174) target = $region24
      $region23: #{encoder_block_forward.5} parent=11 // pred_region
        _
      $region24: #{encoder_block_forward.5} parent=11 // pred_fallthru
        _
    $region12: #{encoder_block_forward.5} parent=5 // pred_fallthru
      _
    %p177 = scmp.lt.s32.totalorder %s12, 2
    // Predicated region
    $region25: #{encoder_block_forward.5} parent=5 // pred_check
      %p178 = pneg %p177
    $region26: #{encoder_block_forward.5} parent=5 // pred_check_branch
      %180 = sbr.rel (%p178) target = $region28
    $region27: #{encoder_block_forward.5} parent=5 // pred_region
      // Predicated region
      $region29: #{encoder_block_forward.5} parent=27 // pred_check
        %p181 = pneg %p32
      $region30: #{encoder_block_forward.5} parent=27 // pred_check_branch
        %183 = sbr.rel (%p181) target = $region32
      $region31: #{encoder_block_forward.5} parent=27 // pred_region
        %p184 = scmp.lt.s32.totalorder %s12, 1
        %s185 = scalar_select %p184, %s12, 1
        %s186 = smul.addr %s185, 2
        %s187 = smul.addr %s186, 8
        %s188 = scalar_lea.vmem %s0, %s187
      $region32: #{encoder_block_forward.5} parent=27 // pred_fallthru
        _
    $region28: #{encoder_block_forward.5} parent=5 // pred_fallthru
      _
    %p189 = scmp.le.s32.totalorder 1, %s12
    %p190 = scmp.lt.s32.totalorder %s12, 3
    %p191 = pnand %p189, %p190
    %p192 = pneg %p191
    // Predicated region
    $region33: #{encoder_block_forward.5} parent=5 // pred_check
      _
    $region34: #{encoder_block_forward.5} parent=5 // pred_check_branch
      %194 = sbr.rel (%p191) target = $region36
    $region35: #{encoder_block_forward.5} parent=5 // pred_region
      %s195 = ssub.s32 %s12, 1
      %p196 = scmp.lt.s32.totalorder %s17, 1
      %s197 = scalar_select %p196, %s17, 1
      %s198 = smul.addr %s197, 2
      %s199 = smul.addr %s198, 8
      %s200 = scalar_lea.vmem %s0, %s199
      %p201 = pneg %p38
      %p202 = pneg %p35
      %p203 = pneg %p59
      %p204 = pneg %p56
      %p205 = pneg %p80
      %p206 = pneg %p77
      %p207 = pneg %p101
      %p208 = pneg %p98
      %p209 = pneg %p127
      %p210 = pneg %p124
      %p211 = scmp.lt.s32.totalorder %s17, 1
      %s212 = scalar_select %p211, %s17, 1
      %s213 = smul.addr %s212, 2
      %s214 = smul.addr %s213, 8
      %s215 = scalar_lea.vmem %s4, %s214
      %p216 = pneg %p153
      %p217 = pneg %p150
      %p218 = scmp.lt.s32.totalorder %s17, 1
      %s219 = scalar_select %p218, %s17, 1
      %s220 = smul.addr %s219, 8
      %s221 = scalar_lea.vmem %s5, %s220
      %p222 = scmp.lt.s32.totalorder %s17, 1
      %s223 = scalar_select %p222, %s17, 1
      %s224 = smul.addr %s223, 2
      %s225 = smul.addr %s224, 8
      %s226 = scalar_lea.vmem %s0, %s225
      %p227 = scmp.lt.s32.totalorder %s17, 1
      %s228 = scalar_select %p227, %s17, 1
      %s229 = smul.addr %s228, 2
      %s230 = smul.addr %s229, 8
      %s231 = scalar_lea.vmem %s4, %s230
      %p232 = scmp.lt.s32.totalorder %s17, 1
      %s233 = scalar_select %p232, %s17, 1
      %s234 = smul.addr %s233, 8
      %s235 = scalar_lea.vmem %s5, %s234
      %v236 = vld [vmem:[%s226] sm:$0xff]
      %v237 = vld [vmem:[%s226 + $0x8] sm:$0xff]
      %v238 = vld [vmem:[%s1] sm:$0xff]
      %240 = vset.pattern.permute.xlu0 0
      %241 = vperm.xlu0 %240, %v238
      %v242 = vpop.permute.xlu0 %241
      %v244 = vmul.f32 %v236, %v242
      %v245 = vmul.f32 %v237, %v242
      %v246 = vld [vmem:[%s2] sm:$0xff]
      %248 = vset.pattern.permute.xlu0 0
      %249 = vperm.xlu0 %248, %v246
      %v250 = vpop.permute.xlu0 %249
      %v252 = vadd.f32 %v244, %v250
      %v253 = vadd.f32 %v245, %v250
      %v254 = vmax.f32 %v252, 0.0
      %v255 = vmax.f32 %v253, 0.0
      %256 = vst [vmem:[%s231] sm:$0xff] %v254
      %257 = vst [vmem:[%s231 + $0x8] sm:$0xff] %v255
      %260 = vrot.lane.b32.xlu0 %v254, 127
      %v261 = vpop.permute.xlu0 %260
      %262 = vrot.lane.b32.xlu0 %v255, 127
      %v263 = vpop.permute.xlu0 %262
      %vm264 = vcmask 1039360
      %v265 = vsel %vm264, %v261, %v263
      %v269 = vsel %vm264, %v263, %v261
      %270 = vrot.lane.b32.xlu0 %v254, 112
      %v271 = vpop.permute.xlu0 %270
      %272 = vrot.lane.b32.xlu0 %v255, 112
      %v273 = vpop.permute.xlu0 %272
      %vm274 = vcmask 916480
      %v275 = vsel %vm274, %v271, %v273
      %v279 = vsel %vm274, %v273, %v271
      %280 = vrot.lane.b32.xlu0 %v254, 111
      %v281 = vpop.permute.xlu0 %280
      %282 = vrot.lane.b32.xlu0 %v255, 111
      %v283 = vpop.permute.xlu0 %282
      %vm284 = vcmask 908288
      %v285 = vsel %vm284, %v281, %v283
      %v289 = vsel %vm284, %v283, %v281
      %v290 = vmax.f32 %v254, %v265
      %v291 = vmax.f32 %v255, %v269
      %v292 = vmax.f32 %v275, %v285
      %v293 = vmax.f32 %v279, %v289
      %v294 = vmax.f32 %v290, %v292
      %v295 = vmax.f32 %v291, %v293
      %v296 = vld [vmem:[%s3] sm:$0xff]
      %v297 = vld [vmem:[%s3 + $0x8] sm:$0xff]
      %v298 = vld [vmem:[%s3 + $0x10] sm:$0xff]
      %v299 = vld [vmem:[%s3 + $0x18] sm:$0xff]
      %v300 = vld [vmem:[%s3 + $0x20] sm:$0xff]
      %v301 = vld [vmem:[%s3 + $0x28] sm:$0xff]
      %v302 = vld [vmem:[%s3 + $0x30] sm:$0xff]
      %v303 = vld [vmem:[%s3 + $0x38] sm:$0xff]
      %v304 = vld [vmem:[%s3 + $0x40] sm:$0xff]
      %v305 = vld [vmem:[%s3 + $0x48] sm:$0xff]
      %v306 = vld [vmem:[%s3 + $0x50] sm:$0xff]
      %v307 = vld [vmem:[%s3 + $0x58] sm:$0xff]
      %v308 = vld [vmem:[%s3 + $0x60] sm:$0xff]
      %v309 = vld [vmem:[%s3 + $0x68] sm:$0xff]
      %v310 = vld [vmem:[%s3 + $0x70] sm:$0xff]
      %v311 = vld [vmem:[%s3 + $0x78] sm:$0xff]
      %v312 = vld [vmem:[%s3 + $0x80] sm:$0xff]
      %v313 = vld [vmem:[%s3 + $0x88] sm:$0xff]
      %v314 = vld [vmem:[%s3 + $0x90] sm:$0xff]
      %v315 = vld [vmem:[%s3 + $0x98] sm:$0xff]
      %v316 = vld [vmem:[%s3 + $0xa0] sm:$0xff]
      %v317 = vld [vmem:[%s3 + $0xa8] sm:$0xff]
      %v318 = vld [vmem:[%s3 + $0xb0] sm:$0xff]
      %v319 = vld [vmem:[%s3 + $0xb8] sm:$0xff]
      %v320 = vld [vmem:[%s3 + $0xc0] sm:$0xff]
      %v321 = vld [vmem:[%s3 + $0xc8] sm:$0xff]
      %v322 = vld [vmem:[%s3 + $0xd0] sm:$0xff]
      %v323 = vld [vmem:[%s3 + $0xd8] sm:$0xff]
      %v324 = vld [vmem:[%s3 + $0xe0] sm:$0xff]
      %v325 = vld [vmem:[%s3 + $0xe8] sm:$0xff]
      %v326 = vld [vmem:[%s3 + $0xf0] sm:$0xff]
      %v327 = vld [vmem:[%s3 + $0xf8] sm:$0xff]
      %328 = vmatprep.subr.mxu0 0.0
      %329 = vmatpush1.msra.mxu0 %v311
      %330 = vmatprep.subr.mxu0 0.0
      %331 = vmatpush1.msra.mxu0 %v310
      %332 = vmatprep.subr.mxu0 0.0
      %333 = vmatpush1.msra.mxu0 %v309
      %334 = vmatprep.subr.mxu0 0.0
      %335 = vmatpush1.msra.mxu0 %v308
      %336 = vmatprep.subr.mxu0 0.0
      %337 = vmatpush1.msra.mxu0 %v307
      %338 = vmatprep.subr.mxu0 0.0
      %339 = vmatpush1.msra.mxu0 %v306
      %340 = vmatprep.subr.mxu0 0.0
      %341 = vmatpush1.msra.mxu0 %v305
      %342 = vmatprep.subr.mxu0 0.0
      %343 = vmatpush1.msra.mxu0 %v304
      %344 = vmatprep.subr.mxu0 0.0
      %345 = vmatpush1.msra.mxu0 %v303
      %346 = vmatprep.subr.mxu0 0.0
      %347 = vmatpush1.msra.mxu0 %v302
      %348 = vmatprep.subr.mxu0 0.0
      %349 = vmatpush1.msra.mxu0 %v301
      %350 = vmatprep.subr.mxu0 0.0
      %351 = vmatpush1.msra.mxu0 %v300
      %352 = vmatprep.subr.mxu0 0.0
      %353 = vmatpush1.msra.mxu0 %v299
      %354 = vmatprep.subr.mxu0 0.0
      %355 = vmatpush1.msra.mxu0 %v298
      %356 = vmatprep.subr.mxu0 0.0
      %357 = vmatpush1.msra.mxu0 %v297
      %358 = vmatprep.subr.mxu0 0.0
      %359 = vmatpush1.msra.mxu0 %v296
      %360 = vmatprep.subr.mxu0 0.0
      %361 = vmatpush2.msra.mxu0 %v327
      %362 = vmatprep.subr.mxu0 0.0
      %363 = vmatpush2.msra.mxu0 %v326
      %364 = vmatprep.subr.mxu0 0.0
      %365 = vmatpush2.msra.mxu0 %v325
      %366 = vmatprep.subr.mxu0 0.0
      %367 = vmatpush2.msra.mxu0 %v324
      %368 = vmatprep.subr.mxu0 0.0
      %369 = vmatpush2.msra.mxu0 %v323
      %370 = vmatprep.subr.mxu0 0.0
      %371 = vmatpush2.msra.mxu0 %v322
      %372 = vmatprep.subr.mxu0 0.0
      %373 = vmatpush2.msra.mxu0 %v321
      %374 = vmatprep.subr.mxu0 0.0
      %375 = vmatpush2.msra.mxu0 %v320
      %376 = vmatprep.subr.mxu0 0.0
      %377 = vmatpush2.msra.mxu0 %v319
      %378 = vmatprep.subr.mxu0 0.0
      %379 = vmatpush2.msra.mxu0 %v318
      %380 = vmatprep.subr.mxu0 0.0
      %381 = vmatpush2.msra.mxu0 %v317
      %382 = vmatprep.subr.mxu0 0.0
      %383 = vmatpush2.msra.mxu0 %v316
      %384 = vmatprep.subr.mxu0 0.0
      %385 = vmatpush2.msra.mxu0 %v315
      %386 = vmatprep.subr.mxu0 0.0
      %387 = vmatpush2.msra.mxu0 %v314
      %388 = vmatprep.subr.mxu0 0.0
      %389 = vmatpush2.msra.mxu0 %v313
      %390 = vmatprep.subr.mxu0 0.0
      %391 = vmatpush2.msra.mxu0 %v312
      %392 = vmatprep.mubr.f32.mxu0 %v295
      %393 = vmatmul.mubr.f32.gmra.mxu0 %v294
      %v394 = vpop.f32.mrf.mxu0
      %v395 = vadd.f32 0.0, %v394
      %v396 = vpop.f32.mrf.mxu0
      %397 = vdwg.mxu0
      %vm398 = vcmask 523264
      %399 = vst.msk [vmem:[%s235] sm:$0xff] %vm398, %v395
      %p400 = scmp.lt.s32.totalorder %s17, 1
      %s401 = scalar_select %p400, %s17, 1
      %s402 = smul.addr %s401, 2
      %s403 = smul.addr %s402, 8
      %s404 = scalar_lea.vmem %s4, %s403
      %p405 = scmp.lt.s32.totalorder %s17, 1
      %s406 = scalar_select %p405, %s17, 1
      %s407 = smul.addr %s406, 8
      %s408 = scalar_lea.vmem %s5, %s407
      // Predicated region
      $region37: #{encoder_block_forward.5} parent=35 // pred_check
        %p409 = pneg %p124
      $region38: #{encoder_block_forward.5} parent=35 // pred_check_branch
        %411 = sbr.rel (%p409) target = $region40
      $region39: #{encoder_block_forward.5} parent=35 // pred_region
        _
      $region40: #{encoder_block_forward.5} parent=35 // pred_fallthru
        _
      // Predicated region
      $region41: #{encoder_block_forward.5} parent=35 // pred_check
        %p412 = pneg %p150
      $region42: #{encoder_block_forward.5} parent=35 // pred_check_branch
        %414 = sbr.rel (%p412) target = $region44
      $region43: #{encoder_block_forward.5} parent=35 // pred_region
        _
      $region44: #{encoder_block_forward.5} parent=35 // pred_fallthru
        _
    $region36: #{encoder_block_forward.5} parent=5 // pred_fallthru
      _
    %p415 = scmp.le.s32.totalorder 2, %s12
    // Predicated region
    $region45: #{encoder_block_forward.5} parent=5 // pred_check
      %p416 = pneg %p415
    $region46: #{encoder_block_forward.5} parent=5 // pred_check_branch
      %418 = sbr.rel (%p416) target = $region48
    $region47: #{encoder_block_forward.5} parent=5 // pred_region
      %s419 = ssub.s32 %s12, 2
      // Predicated region
      $region49: #{encoder_block_forward.5} parent=47 // pred_check
        %p420 = pneg %p130
      $region50: #{encoder_block_forward.5} parent=47 // pred_check_branch
        %422 = sbr.rel (%p420) target = $region52
      $region51: #{encoder_block_forward.5} parent=47 // pred_region
        %p423 = scmp.lt.s32.totalorder %s18, 1
        %s424 = scalar_select %p423, %s18, 1
        %s425 = smul.addr %s424, 2
        %s426 = smul.addr %s425, 8
        %s427 = scalar_lea.vmem %s4, %s426
      $region52: #{encoder_block_forward.5} parent=47 // pred_fallthru
        _
      // Predicated region
      $region53: #{encoder_block_forward.5} parent=47 // pred_check
        %p428 = pneg %p156
      $region54: #{encoder_block_forward.5} parent=47 // pred_check_branch
        %430 = sbr.rel (%p428) target = $region56
      $region55: #{encoder_block_forward.5} parent=47 // pred_region
        %p431 = scmp.lt.s32.totalorder %s18, 1
        %s432 = scalar_select %p431, %s18, 1
        %s433 = smul.addr %s432, 8
        %s434 = scalar_lea.vmem %s5, %s433
      $region56: #{encoder_block_forward.5} parent=47 // pred_fallthru
        _
    $region48: #{encoder_block_forward.5} parent=5 // pred_fallthru
      _
  $region6: #{encoder_block_forward.5} parent=0 // loop_footer
    %s16 = sadd.s32 1, %s12
  $region7: #{encoder_block_forward.5} parent=0 // loop_footer_branch
    %11 = sbr.rel target = $region3
  $region8: #{encoder_block_forward.5} parent=0 // loop_exit
    _

</llo_original>
